<compile_context>
chip_gen: v7x
topology: tpu7x:2x2x1
jax: 0.10.0
libtpu: 0.0.40
codegen_flags: <defaults>
</compile_context>

<pallas_src>
import functools

import numpy as np

import jax
import jax.numpy as jnp
from jax.experimental import pallas as pl
from jax.experimental.pallas import tpu as pltpu


# ----------------------------- Pallas kernel --------------------------------

def _basic_block_kernel(x_ref, w1_ref, w2_ref, mask_ref, o_ref,
                        xpad_ref, patch_ref, *, width, lpad, isfinal):
    # x_ref    : (N, Cin, L)     whole batch, channel-major per image, spatial flattened
    #                            (l = h*width + w)
    # w1_ref   : (Cout, 9*Cin)   conv1 weights, column = (kh*3 + kw)*Cin + ci
    # w2_ref   : (Cout, 9*Cout)  conv2 weights, same flattening
    # mask_ref : (9, L)          fp32 0/1 tap-validity mask (causal time pad + freq pad)
    # o_ref    : (N, Cout, L)
    # xpad_ref : (Cin, L + 2*lpad)  VMEM scratch: flat, zero-padded staging buffer (one image)
    # patch_ref: (9*Cin, N*L)       VMEM scratch: im2col patch matrix for the whole batch
    N, C, L = x_ref.shape

    # Zero ONLY the pad strips, once; the interior is overwritten before each use and the pads
    # are never written again (this realises the frequency zero-padding; intra-row / causal
    # invalidity is handled by mask_ref).
    zpad = jnp.zeros((C, lpad), dtype=xpad_ref.dtype)
    xpad_ref[:, :lpad] = zpad
    xpad_ref[:, lpad + L:] = zpad

    def build_patches(get_img):
        # Fill patch_ref (9*C, N*L) from per-image (C, L) activations provided by get_img(n).
        for n in range(N):                               # static loop, tiny N
            xpad_ref[:, lpad:lpad + L] = get_img(n)      # lane-aligned store (lpad % 128 == 0)
            for kh in range(3):
                for kw in range(3):
                    tap = kh * 3 + kw
                    d = (kh - 1) * width + (kw - 2)      # flat input offset of this tap
                    window = xpad_ref[:, lpad + d:lpad + d + L]      # (C, L) shifted copy
                    patch_ref[tap * C:(tap + 1) * C, n * L:(n + 1) * L] = (
                        window * mask_ref[tap:tap + 1, :])

    # conv1 + ReLU: one lane-dense matmul over the whole batch, (Cout, 9C) x (9C, N*L).
    build_patches(lambda n: x_ref[n].astype(jnp.float32))
    mid = jnp.maximum(
        jnp.dot(w1_ref[...], patch_ref[...], preferred_element_type=jnp.float32), 0.0)

    # conv2 (downsample is None, so the identity path is the raw input).
    build_patches(lambda n: mid[:, n * L:(n + 1) * L])
    out = jnp.dot(w2_ref[...], patch_ref[...], preferred_element_type=jnp.float32)

    # residual + (ReLU) + store; reload the identity from the input ref at the point of use.
    for n in range(N):
        res = out[:, n * L:(n + 1) * L] + x_ref[n].astype(jnp.float32)
        if not isfinal:
            res = jnp.maximum(res, 0.0)
        o_ref[n] = res.astype(o_ref.dtype)


# ------------------------------ JAX wrapper ----------------------------------

def weight_norm_effective(v, g):
    # PyTorch weight_norm(dim=0): w[o] = g[o] * v[o] / ||v[o]||_2, norm over (Cin, kh, kw).
    # v: (Cout, Cin, 3, 3) OIHW;  g: (Cout,)
    norm = jnp.sqrt(jnp.sum(v * v, axis=(1, 2, 3), keepdims=True))
    return v * (g.reshape(-1, 1, 1, 1) / norm)


@functools.partial(jax.jit, static_argnames=("isfinal",))
def basic_block_forward(x_nchw, w1_oihw, w2_oihw, *, isfinal=False):
    N, C, H, W = x_nchw.shape
    Cout = w1_oihw.shape[0]
    assert Cout == C, "residual path requires in_channels == out_channels (downsample is None)"
    L = H * W
    assert L % 128 == 0, "per-image flattened spatial size must be a multiple of 128"
    lpad = ((W + 2 + 127) // 128) * 128   # pad strip width of the flat staging buffer

    # No N<->C transpose: keep (N, C, L); H, W are already the minor dims so this is free.
    x_flat = x_nchw.reshape(N, C, L)
    # Weights OIHW -> (O, (kh*3+kw)*I + i)
    w1_flat = jnp.transpose(w1_oihw, (0, 2, 3, 1)).reshape(Cout, 9 * C)
    w2_flat = jnp.transpose(w2_oihw, (0, 2, 3, 1)).reshape(Cout, 9 * Cout)

    # Per-tap validity masks (causal temporal pad (2,0), frequency pad (1,1)); static per shape.
    hh = np.arange(H).reshape(H, 1)
    ww = np.arange(W).reshape(1, W)
    m = []
    for kh in range(3):
        for kw in range(3):
            dh, dw = kh - 1, kw - 2
            valid = (hh + dh >= 0) & (hh + dh < H) & (ww + dw >= 0) & (ww + dw < W)
            m.append(valid.reshape(-1))
    masks = jnp.asarray(np.stack(m).astype(np.float32))     # (9, H*W)

    # Advisory cost estimate: two (Cout, 9C) x (9C, N*L) matmuls + the bracketing HBM traffic.
    flops = 2 * 2 * Cout * (9 * C) * (N * L)
    bytes_accessed = 4 * (N * C * L + Cout * 9 * C + Cout * 9 * Cout + 9 * L + N * Cout * L)
    cost = pl.CostEstimate(flops=flops, transcendentals=0, bytes_accessed=bytes_accessed)

    kernel = functools.partial(_basic_block_kernel, width=W, lpad=lpad, isfinal=isfinal)
    out_flat = pl.pallas_call(
        kernel,
        out_shape=jax.ShapeDtypeStruct((N, Cout, L), x_nchw.dtype),
        # Single invocation (no grid): whole arrays live in VMEM; batch is folded into the
        # lane axis inside the kernel so both convs run as one lane-dense matmul each.
        scratch_shapes=[
            pltpu.VMEM((C, L + 2 * lpad), jnp.float32),      # zero-padded flat staging buffer
            pltpu.VMEM((9 * C, N * L), jnp.float32),         # im2col patch matrix (whole batch)
        ],
        cost_estimate=cost,
    )(x_flat, w1_flat, w2_flat, masks)

    # back to NCHW like the PyTorch module (free reshape, minor dims unchanged)
    return out_flat.reshape(N, Cout, H, W)
    # TODO(synk): `downsample` submodule is None in the default constructor and is not implemented.


# ------------------------------ reference (pure JAX) --------------------------

def _ref_conv(x, w):
    xp = jnp.pad(x, ((0, 0), (0, 0), (1, 1), (2, 0)))   # freq pad (1,1), causal time pad (2,0)
    return jax.lax.conv_general_dilated(
        xp, w, window_strides=(1, 1), padding="VALID",
        dimension_numbers=("NCHW", "OIHW", "NCHW"),
        precision=jax.lax.Precision.HIGHEST)


def _ref_forward(x, w1, w2, *, isfinal=False):
    out = jnp.maximum(_ref_conv(x, w1), 0.0)
    out = _ref_conv(out, w2) + x
    if not isfinal:
        out = jnp.maximum(out, 0.0)
    return out


# ---------------------------------- main --------------------------------------

if __name__ == "__main__":
    key = jax.random.PRNGKey(0)
    N, C, H, W = 2, 4, 16, 16          # BasicBlock(in_channels=4, out_channels=4, stride=1)
    k_x, k_v1, k_g1, k_v2, k_g2 = jax.random.split(key, 5)

    x = jax.random.normal(k_x, (N, C, H, W), dtype=jnp.float32)

    # weight_norm parameters (v in OIHW like PyTorch, g per output channel)
    v1 = jax.random.normal(k_v1, (C, C, 3, 3), dtype=jnp.float32) * 0.1
    g1 = jax.random.uniform(k_g1, (C,), dtype=jnp.float32, minval=0.5, maxval=1.5)
    v2 = jax.random.normal(k_v2, (C, C, 3, 3), dtype=jnp.float32) * 0.1
    g2 = jax.random.uniform(k_g2, (C,), dtype=jnp.float32, minval=0.5, maxval=1.5)

    w1 = weight_norm_effective(v1, g1)   # (Cout, Cin, 3, 3)
    w2 = weight_norm_effective(v2, g2)

    out = basic_block_forward(x, w1, w2, isfinal=False)
    out = jax.block_until_ready(out)

    ref = _ref_forward(x, w1, w2, isfinal=False)
    assert out.shape == (N, C, H, W)
    assert jnp.allclose(out, ref, rtol=1e-4, atol=1e-4), "mismatch vs pure-JAX reference"

    print("KERNEL_OK")
</pallas_src>

<mosaic_0001>
module attributes {stable_mosaic.version = 11 : i64} {
  func.func @_basic_block_kernel(%arg0: memref<2x4x256xf32, #tpu.memory_space<vmem>>, %arg1: memref<4x36xf32, #tpu.memory_space<vmem>>, %arg2: memref<4x36xf32, #tpu.memory_space<vmem>>, %arg3: memref<9x256xf32, #tpu.memory_space<vmem>>, %arg4: memref<2x4x256xf32, #tpu.memory_space<vmem>>, %arg5: memref<4x512xf32, #tpu.memory_space<vmem>>, %arg6: memref<36x512xf32, #tpu.memory_space<vmem>>) attributes {dimension_semantics = [], scalar_prefetch = 0 : i64, scratch_operands = 2 : i64, tpu.core_type = #tpu.core_type<tc>} {
    %cst = arith.constant 0.000000e+00 : f32
    %0 = vector.broadcast %cst : f32 to vector<4x128xf32>
    %c0 = arith.constant 0 : index
    %c0_0 = arith.constant 0 : index
    %1 = vector.load %arg5[%c0, %c0_0] : memref<4x512xf32, #tpu.memory_space<vmem>>, vector<4x128xf32>
    tpu.vector_store %arg5[%c0, %c0_0], %0 {strides = array<i32>} : memref<4x512xf32, #tpu.memory_space<vmem>>, vector<4x128xf32>,
    %c0_1 = arith.constant 0 : index
    %c384 = arith.constant 384 : index
    %2 = vector.load %arg5[%c0_1, %c384] : memref<4x512xf32, #tpu.memory_space<vmem>>, vector<4x128xf32>
    tpu.vector_store %arg5[%c0_1, %c384], %0 {strides = array<i32>} : memref<4x512xf32, #tpu.memory_space<vmem>>, vector<4x128xf32>,
    %c0_2 = arith.constant 0 : index
    %c0_3 = arith.constant 0 : index
    %c0_4 = arith.constant 0 : index
    %3 = vector.load %arg0[%c0_2, %c0_3, %c0_4] : memref<2x4x256xf32, #tpu.memory_space<vmem>>, vector<1x4x256xf32>
    %4 = vector.shape_cast %3 : vector<1x4x256xf32> to vector<4x256xf32>
    %c0_5 = arith.constant 0 : index
    %c128 = arith.constant 128 : index
    %5 = vector.load %arg5[%c0_5, %c128] : memref<4x512xf32, #tpu.memory_space<vmem>>, vector<4x256xf32>
    tpu.vector_store %arg5[%c0_5, %c128], %4 {strides = array<i32>} : memref<4x512xf32, #tpu.memory_space<vmem>>, vector<4x256xf32>,
    %c0_6 = arith.constant 0 : index
    %c110 = arith.constant 110 : index
    %6 = vector.load %arg5[%c0_6, %c110] : memref<4x512xf32, #tpu.memory_space<vmem>>, vector<4x256xf32>
    %c0_7 = arith.constant 0 : index
    %c0_8 = arith.constant 0 : index
    %7 = vector.load %arg3[%c0_7, %c0_8] : memref<9x256xf32, #tpu.memory_space<vmem>>, vector<1x256xf32>
    %8 = vector.broadcast %7 : vector<1x256xf32> to vector<4x256xf32>
    %9 = arith.mulf %6, %8 : vector<4x256xf32>
    %c0_9 = arith.constant 0 : index
    %c0_10 = arith.constant 0 : index
    %10 = vector.load %arg6[%c0_9, %c0_10] : memref<36x512xf32, #tpu.memory_space<vmem>>, vector<4x256xf32>
    tpu.vector_store %arg6[%c0_9, %c0_10], %9 {strides = array<i32>} : memref<36x512xf32, #tpu.memory_space<vmem>>, vector<4x256xf32>,
    %c0_11 = arith.constant 0 : index
    %c111 = arith.constant 111 : index
    %11 = vector.load %arg5[%c0_11, %c111] : memref<4x512xf32, #tpu.memory_space<vmem>>, vector<4x256xf32>
    %c1 = arith.constant 1 : index
    %c0_12 = arith.constant 0 : index
    %12 = vector.load %arg3[%c1, %c0_12] : memref<9x256xf32, #tpu.memory_space<vmem>>, vector<1x256xf32>
    %13 = vector.broadcast %12 : vector<1x256xf32> to vector<4x256xf32>
    %14 = arith.mulf %11, %13 : vector<4x256xf32>
    %c4 = arith.constant 4 : index
    %c0_13 = arith.constant 0 : index
    %15 = vector.load %arg6[%c4, %c0_13] : memref<36x512xf32, #tpu.memory_space<vmem>>, vector<4x256xf32>
    tpu.vector_store %arg6[%c4, %c0_13], %14 {strides = array<i32>} : memref<36x512xf32, #tpu.memory_space<vmem>>, vector<4x256xf32>,
    %c0_14 = arith.constant 0 : index
    %c112 = arith.constant 112 : index
    %16 = vector.load %arg5[%c0_14, %c112] : memref<4x512xf32, #tpu.memory_space<vmem>>, vector<4x256xf32>
    %c2 = arith.constant 2 : index
    %c0_15 = arith.constant 0 : index
    %17 = vector.load %arg3[%c2, %c0_15] : memref<9x256xf32, #tpu.memory_space<vmem>>, vector<1x256xf32>
    %18 = vector.broadcast %17 : vector<1x256xf32> to vector<4x256xf32>
    %19 = arith.mulf %16, %18 : vector<4x256xf32>
    %c8 = arith.constant 8 : index
    %c0_16 = arith.constant 0 : index
    %20 = vector.load %arg6[%c8, %c0_16] : memref<36x512xf32, #tpu.memory_space<vmem>>, vector<4x256xf32>
    tpu.vector_store %arg6[%c8, %c0_16], %19 {strides = array<i32>} : memref<36x512xf32, #tpu.memory_space<vmem>>, vector<4x256xf32>,
    %c0_17 = arith.constant 0 : index
    %c126 = arith.constant 126 : index
    %21 = vector.load %arg5[%c0_17, %c126] : memref<4x512xf32, #tpu.memory_space<vmem>>, vector<4x256xf32>
    %c3 = arith.constant 3 : index
    %c0_18 = arith.constant 0 : index
    %22 = vector.load %arg3[%c3, %c0_18] : memref<9x256xf32, #tpu.memory_space<vmem>>, vector<1x256xf32>
    %23 = vector.broadcast %22 : vector<1x256xf32> to vector<4x256xf32>
    %24 = arith.mulf %21, %23 : vector<4x256xf32>
    %c12 = arith.constant 12 : index
    %c0_19 = arith.constant 0 : index
    %25 = vector.load %arg6[%c12, %c0_19] : memref<36x512xf32, #tpu.memory_space<vmem>>, vector<4x256xf32>
    tpu.vector_store %arg6[%c12, %c0_19], %24 {strides = array<i32>} : memref<36x512xf32, #tpu.memory_space<vmem>>, vector<4x256xf32>,
    %c0_20 = arith.constant 0 : index
    %c127 = arith.constant 127 : index
    %26 = vector.load %arg5[%c0_20, %c127] : memref<4x512xf32, #tpu.memory_space<vmem>>, vector<4x256xf32>
    %c4_21 = arith.constant 4 : index
    %c0_22 = arith.constant 0 : index
    %27 = vector.load %arg3[%c4_21, %c0_22] : memref<9x256xf32, #tpu.memory_space<vmem>>, vector<1x256xf32>
    %28 = vector.broadcast %27 : vector<1x256xf32> to vector<4x256xf32>
    %29 = arith.mulf %26, %28 : vector<4x256xf32>
    %c16 = arith.constant 16 : index
    %c0_23 = arith.constant 0 : index
    %30 = vector.load %arg6[%c16, %c0_23] : memref<36x512xf32, #tpu.memory_space<vmem>>, vector<4x256xf32>
    tpu.vector_store %arg6[%c16, %c0_23], %29 {strides = array<i32>} : memref<36x512xf32, #tpu.memory_space<vmem>>, vector<4x256xf32>,
    %c0_24 = arith.constant 0 : index
    %c128_25 = arith.constant 128 : index
    %31 = vector.load %arg5[%c0_24, %c128_25] : memref<4x512xf32, #tpu.memory_space<vmem>>, vector<4x256xf32>
    %c5 = arith.constant 5 : index
    %c0_26 = arith.constant 0 : index
    %32 = vector.load %arg3[%c5, %c0_26] : memref<9x256xf32, #tpu.memory_space<vmem>>, vector<1x256xf32>
    %33 = vector.broadcast %32 : vector<1x256xf32> to vector<4x256xf32>
    %34 = arith.mulf %31, %33 : vector<4x256xf32>
    %c20 = arith.constant 20 : index
    %c0_27 = arith.constant 0 : index
    %35 = vector.load %arg6[%c20, %c0_27] : memref<36x512xf32, #tpu.memory_space<vmem>>, vector<4x256xf32>
    tpu.vector_store %arg6[%c20, %c0_27], %34 {strides = array<i32>} : memref<36x512xf32, #tpu.memory_space<vmem>>, vector<4x256xf32>,
    %c0_28 = arith.constant 0 : index
    %c142 = arith.constant 142 : index
    %36 = vector.load %arg5[%c0_28, %c142] : memref<4x512xf32, #tpu.memory_space<vmem>>, vector<4x256xf32>
    %c6 = arith.constant 6 : index
    %c0_29 = arith.constant 0 : index
    %37 = vector.load %arg3[%c6, %c0_29] : memref<9x256xf32, #tpu.memory_space<vmem>>, vector<1x256xf32>
    %38 = vector.broadcast %37 : vector<1x256xf32> to vector<4x256xf32>
    %39 = arith.mulf %36, %38 : vector<4x256xf32>
    %c24 = arith.constant 24 : index
    %c0_30 = arith.constant 0 : index
    %40 = vector.load %arg6[%c24, %c0_30] : memref<36x512xf32, #tpu.memory_space<vmem>>, vector<4x256xf32>
    tpu.vector_store %arg6[%c24, %c0_30], %39 {strides = array<i32>} : memref<36x512xf32, #tpu.memory_space<vmem>>, vector<4x256xf32>,
    %c0_31 = arith.constant 0 : index
    %c143 = arith.constant 143 : index
    %41 = vector.load %arg5[%c0_31, %c143] : memref<4x512xf32, #tpu.memory_space<vmem>>, vector<4x256xf32>
    %c7 = arith.constant 7 : index
    %c0_32 = arith.constant 0 : index
    %42 = vector.load %arg3[%c7, %c0_32] : memref<9x256xf32, #tpu.memory_space<vmem>>, vector<1x256xf32>
    %43 = vector.broadcast %42 : vector<1x256xf32> to vector<4x256xf32>
    %44 = arith.mulf %41, %43 : vector<4x256xf32>
    %c28 = arith.constant 28 : index
    %c0_33 = arith.constant 0 : index
    %45 = vector.load %arg6[%c28, %c0_33] : memref<36x512xf32, #tpu.memory_space<vmem>>, vector<4x256xf32>
    tpu.vector_store %arg6[%c28, %c0_33], %44 {strides = array<i32>} : memref<36x512xf32, #tpu.memory_space<vmem>>, vector<4x256xf32>,
    %c0_34 = arith.constant 0 : index
    %c144 = arith.constant 144 : index
    %46 = vector.load %arg5[%c0_34, %c144] : memref<4x512xf32, #tpu.memory_space<vmem>>, vector<4x256xf32>
    %c8_35 = arith.constant 8 : index
    %c0_36 = arith.constant 0 : index
    %47 = vector.load %arg3[%c8_35, %c0_36] : memref<9x256xf32, #tpu.memory_space<vmem>>, vector<1x256xf32>
    %48 = vector.broadcast %47 : vector<1x256xf32> to vector<4x256xf32>
    %49 = arith.mulf %46, %48 : vector<4x256xf32>
    %c32 = arith.constant 32 : index
    %c0_37 = arith.constant 0 : index
    %50 = vector.load %arg6[%c32, %c0_37] : memref<36x512xf32, #tpu.memory_space<vmem>>, vector<4x256xf32>
    tpu.vector_store %arg6[%c32, %c0_37], %49 {strides = array<i32>} : memref<36x512xf32, #tpu.memory_space<vmem>>, vector<4x256xf32>,
    %c1_38 = arith.constant 1 : index
    %c0_39 = arith.constant 0 : index
    %c0_40 = arith.constant 0 : index
    %51 = vector.load %arg0[%c1_38, %c0_39, %c0_40] : memref<2x4x256xf32, #tpu.memory_space<vmem>>, vector<1x4x256xf32>
    %52 = vector.shape_cast %51 : vector<1x4x256xf32> to vector<4x256xf32>
    %c0_41 = arith.constant 0 : index
    %c128_42 = arith.constant 128 : index
    %53 = vector.load %arg5[%c0_41, %c128_42] : memref<4x512xf32, #tpu.memory_space<vmem>>, vector<4x256xf32>
    tpu.vector_store %arg5[%c0_41, %c128_42], %52 {strides = array<i32>} : memref<4x512xf32, #tpu.memory_space<vmem>>, vector<4x256xf32>,
    %c0_43 = arith.constant 0 : index
    %c110_44 = arith.constant 110 : index
    %54 = vector.load %arg5[%c0_43, %c110_44] : memref<4x512xf32, #tpu.memory_space<vmem>>, vector<4x256xf32>
    %c0_45 = arith.constant 0 : index
    %c0_46 = arith.constant 0 : index
    %55 = vector.load %arg3[%c0_45, %c0_46] : memref<9x256xf32, #tpu.memory_space<vmem>>, vector<1x256xf32>
    %56 = vector.broadcast %55 : vector<1x256xf32> to vector<4x256xf32>
    %57 = arith.mulf %54, %56 : vector<4x256xf32>
    %c0_47 = arith.constant 0 : index
    %c256 = arith.constant 256 : index
    %58 = vector.load %arg6[%c0_47, %c256] : memref<36x512xf32, #tpu.memory_space<vmem>>, vector<4x256xf32>
    tpu.vector_store %arg6[%c0_47, %c256], %57 {strides = array<i32>} : memref<36x512xf32, #tpu.memory_space<vmem>>, vector<4x256xf32>,
    %c0_48 = arith.constant 0 : index
    %c111_49 = arith.constant 111 : index
    %59 = vector.load %arg5[%c0_48, %c111_49] : memref<4x512xf32, #tpu.memory_space<vmem>>, vector<4x256xf32>
    %c1_50 = arith.constant 1 : index
    %c0_51 = arith.constant 0 : index
    %60 = vector.load %arg3[%c1_50, %c0_51] : memref<9x256xf32, #tpu.memory_space<vmem>>, vector<1x256xf32>
    %61 = vector.broadcast %60 : vector<1x256xf32> to vector<4x256xf32>
    %62 = arith.mulf %59, %61 : vector<4x256xf32>
    %c4_52 = arith.constant 4 : index
    %c256_53 = arith.constant 256 : index
    %63 = vector.load %arg6[%c4_52, %c256_53] : memref<36x512xf32, #tpu.memory_space<vmem>>, vector<4x256xf32>
    tpu.vector_store %arg6[%c4_52, %c256_53], %62 {strides = array<i32>} : memref<36x512xf32, #tpu.memory_space<vmem>>, vector<4x256xf32>,
    %c0_54 = arith.constant 0 : index
    %c112_55 = arith.constant 112 : index
    %64 = vector.load %arg5[%c0_54, %c112_55] : memref<4x512xf32, #tpu.memory_space<vmem>>, vector<4x256xf32>
    %c2_56 = arith.constant 2 : index
    %c0_57 = arith.constant 0 : index
    %65 = vector.load %arg3[%c2_56, %c0_57] : memref<9x256xf32, #tpu.memory_space<vmem>>, vector<1x256xf32>
    %66 = vector.broadcast %65 : vector<1x256xf32> to vector<4x256xf32>
    %67 = arith.mulf %64, %66 : vector<4x256xf32>
    %c8_58 = arith.constant 8 : index
    %c256_59 = arith.constant 256 : index
    %68 = vector.load %arg6[%c8_58, %c256_59] : memref<36x512xf32, #tpu.memory_space<vmem>>, vector<4x256xf32>
    tpu.vector_store %arg6[%c8_58, %c256_59], %67 {strides = array<i32>} : memref<36x512xf32, #tpu.memory_space<vmem>>, vector<4x256xf32>,
    %c0_60 = arith.constant 0 : index
    %c126_61 = arith.constant 126 : index
    %69 = vector.load %arg5[%c0_60, %c126_61] : memref<4x512xf32, #tpu.memory_space<vmem>>, vector<4x256xf32>
    %c3_62 = arith.constant 3 : index
    %c0_63 = arith.constant 0 : index
    %70 = vector.load %arg3[%c3_62, %c0_63] : memref<9x256xf32, #tpu.memory_space<vmem>>, vector<1x256xf32>
    %71 = vector.broadcast %70 : vector<1x256xf32> to vector<4x256xf32>
    %72 = arith.mulf %69, %71 : vector<4x256xf32>
    %c12_64 = arith.constant 12 : index
    %c256_65 = arith.constant 256 : index
    %73 = vector.load %arg6[%c12_64, %c256_65] : memref<36x512xf32, #tpu.memory_space<vmem>>, vector<4x256xf32>
    tpu.vector_store %arg6[%c12_64, %c256_65], %72 {strides = array<i32>} : memref<36x512xf32, #tpu.memory_space<vmem>>, vector<4x256xf32>,
    %c0_66 = arith.constant 0 : index
    %c127_67 = arith.constant 127 : index
    %74 = vector.load %arg5[%c0_66, %c127_67] : memref<4x512xf32, #tpu.memory_space<vmem>>, vector<4x256xf32>
    %c4_68 = arith.constant 4 : index
    %c0_69 = arith.constant 0 : index
    %75 = vector.load %arg3[%c4_68, %c0_69] : memref<9x256xf32, #tpu.memory_space<vmem>>, vector<1x256xf32>
    %76 = vector.broadcast %75 : vector<1x256xf32> to vector<4x256xf32>
    %77 = arith.mulf %74, %76 : vector<4x256xf32>
    %c16_70 = arith.constant 16 : index
    %c256_71 = arith.constant 256 : index
    %78 = vector.load %arg6[%c16_70, %c256_71] : memref<36x512xf32, #tpu.memory_space<vmem>>, vector<4x256xf32>
    tpu.vector_store %arg6[%c16_70, %c256_71], %77 {strides = array<i32>} : memref<36x512xf32, #tpu.memory_space<vmem>>, vector<4x256xf32>,
    %c0_72 = arith.constant 0 : index
    %c128_73 = arith.constant 128 : index
    %79 = vector.load %arg5[%c0_72, %c128_73] : memref<4x512xf32, #tpu.memory_space<vmem>>, vector<4x256xf32>
    %c5_74 = arith.constant 5 : index
    %c0_75 = arith.constant 0 : index
    %80 = vector.load %arg3[%c5_74, %c0_75] : memref<9x256xf32, #tpu.memory_space<vmem>>, vector<1x256xf32>
    %81 = vector.broadcast %80 : vector<1x256xf32> to vector<4x256xf32>
    %82 = arith.mulf %79, %81 : vector<4x256xf32>
    %c20_76 = arith.constant 20 : index
    %c256_77 = arith.constant 256 : index
    %83 = vector.load %arg6[%c20_76, %c256_77] : memref<36x512xf32, #tpu.memory_space<vmem>>, vector<4x256xf32>
    tpu.vector_store %arg6[%c20_76, %c256_77], %82 {strides = array<i32>} : memref<36x512xf32, #tpu.memory_space<vmem>>, vector<4x256xf32>,
    %c0_78 = arith.constant 0 : index
    %c142_79 = arith.constant 142 : index
    %84 = vector.load %arg5[%c0_78, %c142_79] : memref<4x512xf32, #tpu.memory_space<vmem>>, vector<4x256xf32>
    %c6_80 = arith.constant 6 : index
    %c0_81 = arith.constant 0 : index
    %85 = vector.load %arg3[%c6_80, %c0_81] : memref<9x256xf32, #tpu.memory_space<vmem>>, vector<1x256xf32>
    %86 = vector.broadcast %85 : vector<1x256xf32> to vector<4x256xf32>
    %87 = arith.mulf %84, %86 : vector<4x256xf32>
    %c24_82 = arith.constant 24 : index
    %c256_83 = arith.constant 256 : index
    %88 = vector.load %arg6[%c24_82, %c256_83] : memref<36x512xf32, #tpu.memory_space<vmem>>, vector<4x256xf32>
    tpu.vector_store %arg6[%c24_82, %c256_83], %87 {strides = array<i32>} : memref<36x512xf32, #tpu.memory_space<vmem>>, vector<4x256xf32>,
    %c0_84 = arith.constant 0 : index
    %c143_85 = arith.constant 143 : index
    %89 = vector.load %arg5[%c0_84, %c143_85] : memref<4x512xf32, #tpu.memory_space<vmem>>, vector<4x256xf32>
    %c7_86 = arith.constant 7 : index
    %c0_87 = arith.constant 0 : index
    %90 = vector.load %arg3[%c7_86, %c0_87] : memref<9x256xf32, #tpu.memory_space<vmem>>, vector<1x256xf32>
    %91 = vector.broadcast %90 : vector<1x256xf32> to vector<4x256xf32>
    %92 = arith.mulf %89, %91 : vector<4x256xf32>
    %c28_88 = arith.constant 28 : index
    %c256_89 = arith.constant 256 : index
    %93 = vector.load %arg6[%c28_88, %c256_89] : memref<36x512xf32, #tpu.memory_space<vmem>>, vector<4x256xf32>
    tpu.vector_store %arg6[%c28_88, %c256_89], %92 {strides = array<i32>} : memref<36x512xf32, #tpu.memory_space<vmem>>, vector<4x256xf32>,
    %c0_90 = arith.constant 0 : index
    %c144_91 = arith.constant 144 : index
    %94 = vector.load %arg5[%c0_90, %c144_91] : memref<4x512xf32, #tpu.memory_space<vmem>>, vector<4x256xf32>
    %c8_92 = arith.constant 8 : index
    %c0_93 = arith.constant 0 : index
    %95 = vector.load %arg3[%c8_92, %c0_93] : memref<9x256xf32, #tpu.memory_space<vmem>>, vector<1x256xf32>
    %96 = vector.broadcast %95 : vector<1x256xf32> to vector<4x256xf32>
    %97 = arith.mulf %94, %96 : vector<4x256xf32>
    %c32_94 = arith.constant 32 : index
    %c256_95 = arith.constant 256 : index
    %98 = vector.load %arg6[%c32_94, %c256_95] : memref<36x512xf32, #tpu.memory_space<vmem>>, vector<4x256xf32>
    tpu.vector_store %arg6[%c32_94, %c256_95], %97 {strides = array<i32>} : memref<36x512xf32, #tpu.memory_space<vmem>>, vector<4x256xf32>,
    %c0_96 = arith.constant 0 : index
    %c0_97 = arith.constant 0 : index
    %99 = vector.load %arg1[%c0_96, %c0_97] : memref<4x36xf32, #tpu.memory_space<vmem>>, vector<4x36xf32>
    %c0_98 = arith.constant 0 : index
    %c0_99 = arith.constant 0 : index
    %100 = vector.load %arg6[%c0_98, %c0_99] : memref<36x512xf32, #tpu.memory_space<vmem>>, vector<36x512xf32>
    %cst_100 = arith.constant dense<0.000000e+00> : vector<4x512xf32>
    %101 = tpu.matmul %99, %100, %cst_100 {dimension_numbers = #tpu.dot_dimension_numbers<[1], [0], [0], [1], [0, 0, 1, 1], [], []>} : vector<4x36xf32>, vector<36x512xf32>, vector<4x512xf32> -> vector<4x512xf32>
    %cst_101 = arith.constant 0.000000e+00 : f32
    %102 = vector.broadcast %cst_101 : f32 to vector<4x512xf32>
    %103 = arith.maximumf %101, %102 : vector<4x512xf32>
    %104 = vector.extract_strided_slice %103 {offsets = [0, 0], sizes = [4, 256], strides = [1, 1]} : vector<4x512xf32> to vector<4x256xf32>
    %c0_102 = arith.constant 0 : index
    %c128_103 = arith.constant 128 : index
    %105 = vector.load %arg5[%c0_102, %c128_103] : memref<4x512xf32, #tpu.memory_space<vmem>>, vector<4x256xf32>
    tpu.vector_store %arg5[%c0_102, %c128_103], %104 {strides = array<i32>} : memref<4x512xf32, #tpu.memory_space<vmem>>, vector<4x256xf32>,
    %c0_104 = arith.constant 0 : index
    %c110_105 = arith.constant 110 : index
    %106 = vector.load %arg5[%c0_104, %c110_105] : memref<4x512xf32, #tpu.memory_space<vmem>>, vector<4x256xf32>
    %c0_106 = arith.constant 0 : index
    %c0_107 = arith.constant 0 : index
    %107 = vector.load %arg3[%c0_106, %c0_107] : memref<9x256xf32, #tpu.memory_space<vmem>>, vector<1x256xf32>
    %108 = vector.broadcast %107 : vector<1x256xf32> to vector<4x256xf32>
    %109 = arith.mulf %106, %108 : vector<4x256xf32>
    %c0_108 = arith.constant 0 : index
    %c0_109 = arith.constant 0 : index
    %110 = vector.load %arg6[%c0_108, %c0_109] : memref<36x512xf32, #tpu.memory_space<vmem>>, vector<4x256xf32>
    tpu.vector_store %arg6[%c0_108, %c0_109], %109 {strides = array<i32>} : memref<36x512xf32, #tpu.memory_space<vmem>>, vector<4x256xf32>,
    %c0_110 = arith.constant 0 : index
    %c111_111 = arith.constant 111 : index
    %111 = vector.load %arg5[%c0_110, %c111_111] : memref<4x512xf32, #tpu.memory_space<vmem>>, vector<4x256xf32>
    %c1_112 = arith.constant 1 : index
    %c0_113 = arith.constant 0 : index
    %112 = vector.load %arg3[%c1_112, %c0_113] : memref<9x256xf32, #tpu.memory_space<vmem>>, vector<1x256xf32>
    %113 = vector.broadcast %112 : vector<1x256xf32> to vector<4x256xf32>
    %114 = arith.mulf %111, %113 : vector<4x256xf32>
    %c4_114 = arith.constant 4 : index
    %c0_115 = arith.constant 0 : index
    %115 = vector.load %arg6[%c4_114, %c0_115] : memref<36x512xf32, #tpu.memory_space<vmem>>, vector<4x256xf32>
    tpu.vector_store %arg6[%c4_114, %c0_115], %114 {strides = array<i32>} : memref<36x512xf32, #tpu.memory_space<vmem>>, vector<4x256xf32>,
    %c0_116 = arith.constant 0 : index
    %c112_117 = arith.constant 112 : index
    %116 = vector.load %arg5[%c0_116, %c112_117] : memref<4x512xf32, #tpu.memory_space<vmem>>, vector<4x256xf32>
    %c2_118 = arith.constant 2 : index
    %c0_119 = arith.constant 0 : index
    %117 = vector.load %arg3[%c2_118, %c0_119] : memref<9x256xf32, #tpu.memory_space<vmem>>, vector<1x256xf32>
    %118 = vector.broadcast %117 : vector<1x256xf32> to vector<4x256xf32>
    %119 = arith.mulf %116, %118 : vector<4x256xf32>
    %c8_120 = arith.constant 8 : index
    %c0_121 = arith.constant 0 : index
    %120 = vector.load %arg6[%c8_120, %c0_121] : memref<36x512xf32, #tpu.memory_space<vmem>>, vector<4x256xf32>
    tpu.vector_store %arg6[%c8_120, %c0_121], %119 {strides = array<i32>} : memref<36x512xf32, #tpu.memory_space<vmem>>, vector<4x256xf32>,
    %c0_122 = arith.constant 0 : index
    %c126_123 = arith.constant 126 : index
    %121 = vector.load %arg5[%c0_122, %c126_123] : memref<4x512xf32, #tpu.memory_space<vmem>>, vector<4x256xf32>
    %c3_124 = arith.constant 3 : index
    %c0_125 = arith.constant 0 : index
    %122 = vector.load %arg3[%c3_124, %c0_125] : memref<9x256xf32, #tpu.memory_space<vmem>>, vector<1x256xf32>
    %123 = vector.broadcast %122 : vector<1x256xf32> to vector<4x256xf32>
    %124 = arith.mulf %121, %123 : vector<4x256xf32>
    %c12_126 = arith.constant 12 : index
    %c0_127 = arith.constant 0 : index
    %125 = vector.load %arg6[%c12_126, %c0_127] : memref<36x512xf32, #tpu.memory_space<vmem>>, vector<4x256xf32>
    tpu.vector_store %arg6[%c12_126, %c0_127], %124 {strides = array<i32>} : memref<36x512xf32, #tpu.memory_space<vmem>>, vector<4x256xf32>,
    %c0_128 = arith.constant 0 : index
    %c127_129 = arith.constant 127 : index
    %126 = vector.load %arg5[%c0_128, %c127_129] : memref<4x512xf32, #tpu.memory_space<vmem>>, vector<4x256xf32>
    %c4_130 = arith.constant 4 : index
    %c0_131 = arith.constant 0 : index
    %127 = vector.load %arg3[%c4_130, %c0_131] : memref<9x256xf32, #tpu.memory_space<vmem>>, vector<1x256xf32>
    %128 = vector.broadcast %127 : vector<1x256xf32> to vector<4x256xf32>
    %129 = arith.mulf %126, %128 : vector<4x256xf32>
    %c16_132 = arith.constant 16 : index
    %c0_133 = arith.constant 0 : index
    %130 = vector.load %arg6[%c16_132, %c0_133] : memref<36x512xf32, #tpu.memory_space<vmem>>, vector<4x256xf32>
    tpu.vector_store %arg6[%c16_132, %c0_133], %129 {strides = array<i32>} : memref<36x512xf32, #tpu.memory_space<vmem>>, vector<4x256xf32>,
    %c0_134 = arith.constant 0 : index
    %c128_135 = arith.constant 128 : index
    %131 = vector.load %arg5[%c0_134, %c128_135] : memref<4x512xf32, #tpu.memory_space<vmem>>, vector<4x256xf32>
    %c5_136 = arith.constant 5 : index
    %c0_137 = arith.constant 0 : index
    %132 = vector.load %arg3[%c5_136, %c0_137] : memref<9x256xf32, #tpu.memory_space<vmem>>, vector<1x256xf32>
    %133 = vector.broadcast %132 : vector<1x256xf32> to vector<4x256xf32>
    %134 = arith.mulf %131, %133 : vector<4x256xf32>
    %c20_138 = arith.constant 20 : index
    %c0_139 = arith.constant 0 : index
    %135 = vector.load %arg6[%c20_138, %c0_139] : memref<36x512xf32, #tpu.memory_space<vmem>>, vector<4x256xf32>
    tpu.vector_store %arg6[%c20_138, %c0_139], %134 {strides = array<i32>} : memref<36x512xf32, #tpu.memory_space<vmem>>, vector<4x256xf32>,
    %c0_140 = arith.constant 0 : index
    %c142_141 = arith.constant 142 : index
    %136 = vector.load %arg5[%c0_140, %c142_141] : memref<4x512xf32, #tpu.memory_space<vmem>>, vector<4x256xf32>
    %c6_142 = arith.constant 6 : index
    %c0_143 = arith.constant 0 : index
    %137 = vector.load %arg3[%c6_142, %c0_143] : memref<9x256xf32, #tpu.memory_space<vmem>>, vector<1x256xf32>
    %138 = vector.broadcast %137 : vector<1x256xf32> to vector<4x256xf32>
    %139 = arith.mulf %136, %138 : vector<4x256xf32>
    %c24_144 = arith.constant 24 : index
    %c0_145 = arith.constant 0 : index
    %140 = vector.load %arg6[%c24_144, %c0_145] : memref<36x512xf32, #tpu.memory_space<vmem>>, vector<4x256xf32>
    tpu.vector_store %arg6[%c24_144, %c0_145], %139 {strides = array<i32>} : memref<36x512xf32, #tpu.memory_space<vmem>>, vector<4x256xf32>,
    %c0_146 = arith.constant 0 : index
    %c143_147 = arith.constant 143 : index
    %141 = vector.load %arg5[%c0_146, %c143_147] : memref<4x512xf32, #tpu.memory_space<vmem>>, vector<4x256xf32>
    %c7_148 = arith.constant 7 : index
    %c0_149 = arith.constant 0 : index
    %142 = vector.load %arg3[%c7_148, %c0_149] : memref<9x256xf32, #tpu.memory_space<vmem>>, vector<1x256xf32>
    %143 = vector.broadcast %142 : vector<1x256xf32> to vector<4x256xf32>
    %144 = arith.mulf %141, %143 : vector<4x256xf32>
    %c28_150 = arith.constant 28 : index
    %c0_151 = arith.constant 0 : index
    %145 = vector.load %arg6[%c28_150, %c0_151] : memref<36x512xf32, #tpu.memory_space<vmem>>, vector<4x256xf32>
    tpu.vector_store %arg6[%c28_150, %c0_151], %144 {strides = array<i32>} : memref<36x512xf32, #tpu.memory_space<vmem>>, vector<4x256xf32>,
    %c0_152 = arith.constant 0 : index
    %c144_153 = arith.constant 144 : index
    %146 = vector.load %arg5[%c0_152, %c144_153] : memref<4x512xf32, #tpu.memory_space<vmem>>, vector<4x256xf32>
    %c8_154 = arith.constant 8 : index
    %c0_155 = arith.constant 0 : index
    %147 = vector.load %arg3[%c8_154, %c0_155] : memref<9x256xf32, #tpu.memory_space<vmem>>, vector<1x256xf32>
    %148 = vector.broadcast %147 : vector<1x256xf32> to vector<4x256xf32>
    %149 = arith.mulf %146, %148 : vector<4x256xf32>
    %c32_156 = arith.constant 32 : index
    %c0_157 = arith.constant 0 : index
    %150 = vector.load %arg6[%c32_156, %c0_157] : memref<36x512xf32, #tpu.memory_space<vmem>>, vector<4x256xf32>
    tpu.vector_store %arg6[%c32_156, %c0_157], %149 {strides = array<i32>} : memref<36x512xf32, #tpu.memory_space<vmem>>, vector<4x256xf32>,
    %151 = vector.extract_strided_slice %103 {offsets = [0, 256], sizes = [4, 256], strides = [1, 1]} : vector<4x512xf32> to vector<4x256xf32>
    %c0_158 = arith.constant 0 : index
    %c128_159 = arith.constant 128 : index
    %152 = vector.load %arg5[%c0_158, %c128_159] : memref<4x512xf32, #tpu.memory_space<vmem>>, vector<4x256xf32>
    tpu.vector_store %arg5[%c0_158, %c128_159], %151 {strides = array<i32>} : memref<4x512xf32, #tpu.memory_space<vmem>>, vector<4x256xf32>,
    %c0_160 = arith.constant 0 : index
    %c110_161 = arith.constant 110 : index
    %153 = vector.load %arg5[%c0_160, %c110_161] : memref<4x512xf32, #tpu.memory_space<vmem>>, vector<4x256xf32>
    %c0_162 = arith.constant 0 : index
    %c0_163 = arith.constant 0 : index
    %154 = vector.load %arg3[%c0_162, %c0_163] : memref<9x256xf32, #tpu.memory_space<vmem>>, vector<1x256xf32>
    %155 = vector.broadcast %154 : vector<1x256xf32> to vector<4x256xf32>
    %156 = arith.mulf %153, %155 : vector<4x256xf32>
    %c0_164 = arith.constant 0 : index
    %c256_165 = arith.constant 256 : index
    %157 = vector.load %arg6[%c0_164, %c256_165] : memref<36x512xf32, #tpu.memory_space<vmem>>, vector<4x256xf32>
    tpu.vector_store %arg6[%c0_164, %c256_165], %156 {strides = array<i32>} : memref<36x512xf32, #tpu.memory_space<vmem>>, vector<4x256xf32>,
    %c0_166 = arith.constant 0 : index
    %c111_167 = arith.constant 111 : index
    %158 = vector.load %arg5[%c0_166, %c111_167] : memref<4x512xf32, #tpu.memory_space<vmem>>, vector<4x256xf32>
    %c1_168 = arith.constant 1 : index
    %c0_169 = arith.constant 0 : index
    %159 = vector.load %arg3[%c1_168, %c0_169] : memref<9x256xf32, #tpu.memory_space<vmem>>, vector<1x256xf32>
    %160 = vector.broadcast %159 : vector<1x256xf32> to vector<4x256xf32>
    %161 = arith.mulf %158, %160 : vector<4x256xf32>
    %c4_170 = arith.constant 4 : index
    %c256_171 = arith.constant 256 : index
    %162 = vector.load %arg6[%c4_170, %c256_171] : memref<36x512xf32, #tpu.memory_space<vmem>>, vector<4x256xf32>
    tpu.vector_store %arg6[%c4_170, %c256_171], %161 {strides = array<i32>} : memref<36x512xf32, #tpu.memory_space<vmem>>, vector<4x256xf32>,
    %c0_172 = arith.constant 0 : index
    %c112_173 = arith.constant 112 : index
    %163 = vector.load %arg5[%c0_172, %c112_173] : memref<4x512xf32, #tpu.memory_space<vmem>>, vector<4x256xf32>
    %c2_174 = arith.constant 2 : index
    %c0_175 = arith.constant 0 : index
    %164 = vector.load %arg3[%c2_174, %c0_175] : memref<9x256xf32, #tpu.memory_space<vmem>>, vector<1x256xf32>
    %165 = vector.broadcast %164 : vector<1x256xf32> to vector<4x256xf32>
    %166 = arith.mulf %163, %165 : vector<4x256xf32>
    %c8_176 = arith.constant 8 : index
    %c256_177 = arith.constant 256 : index
    %167 = vector.load %arg6[%c8_176, %c256_177] : memref<36x512xf32, #tpu.memory_space<vmem>>, vector<4x256xf32>
    tpu.vector_store %arg6[%c8_176, %c256_177], %166 {strides = array<i32>} : memref<36x512xf32, #tpu.memory_space<vmem>>, vector<4x256xf32>,
    %c0_178 = arith.constant 0 : index
    %c126_179 = arith.constant 126 : index
    %168 = vector.load %arg5[%c0_178, %c126_179] : memref<4x512xf32, #tpu.memory_space<vmem>>, vector<4x256xf32>
    %c3_180 = arith.constant 3 : index
    %c0_181 = arith.constant 0 : index
    %169 = vector.load %arg3[%c3_180, %c0_181] : memref<9x256xf32, #tpu.memory_space<vmem>>, vector<1x256xf32>
    %170 = vector.broadcast %169 : vector<1x256xf32> to vector<4x256xf32>
    %171 = arith.mulf %168, %170 : vector<4x256xf32>
    %c12_182 = arith.constant 12 : index
    %c256_183 = arith.constant 256 : index
    %172 = vector.load %arg6[%c12_182, %c256_183] : memref<36x512xf32, #tpu.memory_space<vmem>>, vector<4x256xf32>
    tpu.vector_store %arg6[%c12_182, %c256_183], %171 {strides = array<i32>} : memref<36x512xf32, #tpu.memory_space<vmem>>, vector<4x256xf32>,
    %c0_184 = arith.constant 0 : index
    %c127_185 = arith.constant 127 : index
    %173 = vector.load %arg5[%c0_184, %c127_185] : memref<4x512xf32, #tpu.memory_space<vmem>>, vector<4x256xf32>
    %c4_186 = arith.constant 4 : index
    %c0_187 = arith.constant 0 : index
    %174 = vector.load %arg3[%c4_186, %c0_187] : memref<9x256xf32, #tpu.memory_space<vmem>>, vector<1x256xf32>
    %175 = vector.broadcast %174 : vector<1x256xf32> to vector<4x256xf32>
    %176 = arith.mulf %173, %175 : vector<4x256xf32>
    %c16_188 = arith.constant 16 : index
    %c256_189 = arith.constant 256 : index
    %177 = vector.load %arg6[%c16_188, %c256_189] : memref<36x512xf32, #tpu.memory_space<vmem>>, vector<4x256xf32>
    tpu.vector_store %arg6[%c16_188, %c256_189], %176 {strides = array<i32>} : memref<36x512xf32, #tpu.memory_space<vmem>>, vector<4x256xf32>,
    %c0_190 = arith.constant 0 : index
    %c128_191 = arith.constant 128 : index
    %178 = vector.load %arg5[%c0_190, %c128_191] : memref<4x512xf32, #tpu.memory_space<vmem>>, vector<4x256xf32>
    %c5_192 = arith.constant 5 : index
    %c0_193 = arith.constant 0 : index
    %179 = vector.load %arg3[%c5_192, %c0_193] : memref<9x256xf32, #tpu.memory_space<vmem>>, vector<1x256xf32>
    %180 = vector.broadcast %179 : vector<1x256xf32> to vector<4x256xf32>
    %181 = arith.mulf %178, %180 : vector<4x256xf32>
    %c20_194 = arith.constant 20 : index
    %c256_195 = arith.constant 256 : index
    %182 = vector.load %arg6[%c20_194, %c256_195] : memref<36x512xf32, #tpu.memory_space<vmem>>, vector<4x256xf32>
    tpu.vector_store %arg6[%c20_194, %c256_195], %181 {strides = array<i32>} : memref<36x512xf32, #tpu.memory_space<vmem>>, vector<4x256xf32>,
    %c0_196 = arith.constant 0 : index
    %c142_197 = arith.constant 142 : index
    %183 = vector.load %arg5[%c0_196, %c142_197] : memref<4x512xf32, #tpu.memory_space<vmem>>, vector<4x256xf32>
    %c6_198 = arith.constant 6 : index
    %c0_199 = arith.constant 0 : index
    %184 = vector.load %arg3[%c6_198, %c0_199] : memref<9x256xf32, #tpu.memory_space<vmem>>, vector<1x256xf32>
    %185 = vector.broadcast %184 : vector<1x256xf32> to vector<4x256xf32>
    %186 = arith.mulf %183, %185 : vector<4x256xf32>
    %c24_200 = arith.constant 24 : index
    %c256_201 = arith.constant 256 : index
    %187 = vector.load %arg6[%c24_200, %c256_201] : memref<36x512xf32, #tpu.memory_space<vmem>>, vector<4x256xf32>
    tpu.vector_store %arg6[%c24_200, %c256_201], %186 {strides = array<i32>} : memref<36x512xf32, #tpu.memory_space<vmem>>, vector<4x256xf32>,
    %c0_202 = arith.constant 0 : index
    %c143_203 = arith.constant 143 : index
    %188 = vector.load %arg5[%c0_202, %c143_203] : memref<4x512xf32, #tpu.memory_space<vmem>>, vector<4x256xf32>
    %c7_204 = arith.constant 7 : index
    %c0_205 = arith.constant 0 : index
    %189 = vector.load %arg3[%c7_204, %c0_205] : memref<9x256xf32, #tpu.memory_space<vmem>>, vector<1x256xf32>
    %190 = vector.broadcast %189 : vector<1x256xf32> to vector<4x256xf32>
    %191 = arith.mulf %188, %190 : vector<4x256xf32>
    %c28_206 = arith.constant 28 : index
    %c256_207 = arith.constant 256 : index
    %192 = vector.load %arg6[%c28_206, %c256_207] : memref<36x512xf32, #tpu.memory_space<vmem>>, vector<4x256xf32>
    tpu.vector_store %arg6[%c28_206, %c256_207], %191 {strides = array<i32>} : memref<36x512xf32, #tpu.memory_space<vmem>>, vector<4x256xf32>,
    %c0_208 = arith.constant 0 : index
    %c144_209 = arith.constant 144 : index
    %193 = vector.load %arg5[%c0_208, %c144_209] : memref<4x512xf32, #tpu.memory_space<vmem>>, vector<4x256xf32>
    %c8_210 = arith.constant 8 : index
    %c0_211 = arith.constant 0 : index
    %194 = vector.load %arg3[%c8_210, %c0_211] : memref<9x256xf32, #tpu.memory_space<vmem>>, vector<1x256xf32>
    %195 = vector.broadcast %194 : vector<1x256xf32> to vector<4x256xf32>
    %196 = arith.mulf %193, %195 : vector<4x256xf32>
    %c32_212 = arith.constant 32 : index
    %c256_213 = arith.constant 256 : index
    %197 = vector.load %arg6[%c32_212, %c256_213] : memref<36x512xf32, #tpu.memory_space<vmem>>, vector<4x256xf32>
    tpu.vector_store %arg6[%c32_212, %c256_213], %196 {strides = array<i32>} : memref<36x512xf32, #tpu.memory_space<vmem>>, vector<4x256xf32>,
    %c0_214 = arith.constant 0 : index
    %c0_215 = arith.constant 0 : index
    %198 = vector.load %arg2[%c0_214, %c0_215] : memref<4x36xf32, #tpu.memory_space<vmem>>, vector<4x36xf32>
    %c0_216 = arith.constant 0 : index
    %c0_217 = arith.constant 0 : index
    %199 = vector.load %arg6[%c0_216, %c0_217] : memref<36x512xf32, #tpu.memory_space<vmem>>, vector<36x512xf32>
    %cst_218 = arith.constant dense<0.000000e+00> : vector<4x512xf32>
    %200 = tpu.matmul %198, %199, %cst_218 {dimension_numbers = #tpu.dot_dimension_numbers<[1], [0], [0], [1], [0, 0, 1, 1], [], []>} : vector<4x36xf32>, vector<36x512xf32>, vector<4x512xf32> -> vector<4x512xf32>
    %201 = vector.extract_strided_slice %200 {offsets = [0, 0], sizes = [4, 256], strides = [1, 1]} : vector<4x512xf32> to vector<4x256xf32>
    %c0_219 = arith.constant 0 : index
    %c0_220 = arith.constant 0 : index
    %c0_221 = arith.constant 0 : index
    %202 = vector.load %arg0[%c0_219, %c0_220, %c0_221] : memref<2x4x256xf32, #tpu.memory_space<vmem>>, vector<1x4x256xf32>
    %203 = vector.shape_cast %202 : vector<1x4x256xf32> to vector<4x256xf32>
    %204 = arith.addf %201, %203 : vector<4x256xf32>
    %cst_222 = arith.constant 0.000000e+00 : f32
    %205 = vector.broadcast %cst_222 : f32 to vector<4x256xf32>
    %206 = arith.maximumf %204, %205 : vector<4x256xf32>
    %c0_223 = arith.constant 0 : index
    %c0_224 = arith.constant 0 : index
    %c0_225 = arith.constant 0 : index
    %207 = vector.load %arg4[%c0_223, %c0_224, %c0_225] : memref<2x4x256xf32, #tpu.memory_space<vmem>>, vector<1x4x256xf32>
    %208 = vector.shape_cast %207 : vector<1x4x256xf32> to vector<4x256xf32>
    %209 = vector.shape_cast %206 : vector<4x256xf32> to vector<1x4x256xf32>
    tpu.vector_store %arg4[%c0_223, %c0_224, %c0_225], %209 {strides = array<i32>} : memref<2x4x256xf32, #tpu.memory_space<vmem>>, vector<1x4x256xf32>,
    %210 = vector.extract_strided_slice %200 {offsets = [0, 256], sizes = [4, 256], strides = [1, 1]} : vector<4x512xf32> to vector<4x256xf32>
    %c1_226 = arith.constant 1 : index
    %c0_227 = arith.constant 0 : index
    %c0_228 = arith.constant 0 : index
    %211 = vector.load %arg0[%c1_226, %c0_227, %c0_228] : memref<2x4x256xf32, #tpu.memory_space<vmem>>, vector<1x4x256xf32>
    %212 = vector.shape_cast %211 : vector<1x4x256xf32> to vector<4x256xf32>
    %213 = arith.addf %210, %212 : vector<4x256xf32>
    %cst_229 = arith.constant 0.000000e+00 : f32
    %214 = vector.broadcast %cst_229 : f32 to vector<4x256xf32>
    %215 = arith.maximumf %213, %214 : vector<4x256xf32>
    %c1_230 = arith.constant 1 : index
    %c0_231 = arith.constant 0 : index
    %c0_232 = arith.constant 0 : index
    %216 = vector.load %arg4[%c1_230, %c0_231, %c0_232] : memref<2x4x256xf32, #tpu.memory_space<vmem>>, vector<1x4x256xf32>
    %217 = vector.shape_cast %216 : vector<1x4x256xf32> to vector<4x256xf32>
    %218 = vector.shape_cast %215 : vector<4x256xf32> to vector<1x4x256xf32>
    tpu.vector_store %arg4[%c1_230, %c0_231, %c0_232], %218 {strides = array<i32>} : memref<2x4x256xf32, #tpu.memory_space<vmem>>, vector<1x4x256xf32>,
    return
  }
}

</mosaic_0001>

<llo_original>
// kernel: basic_block_forward.1
$region0: #{basic_block_forward.1}
  #allocation0 [shape = 'u32[]', space=smem, size = 0x4, offset = 0x4, fixed_abs, tag = 'smem constant byte address 0x4 - core index']
  #allocation1 [shape = 'u32[144,128]{1,0:T(1,128)}', space=vmem, size = 0x12000, scoped, tag = 'internal scratch']
  #allocation2 [shape = 'f32[4,512]{1,0:T(4,128)}', space=vmem, size = 0x2000, scoped, tag = 'scratch operand']
  #allocation3 [shape = 'f32[36,512]{1,0:T(8,128)}', space=vmem, size = 0x14000, scoped, tag = 'scratch operand']
  %s0 = inlined_call_operand.vmem [shape: f32[2,4,256], index: 0, kind: input, shape index: {}]
  %s1 = inlined_call_operand.vmem [shape: f32[4,36], index: 1, kind: input, shape index: {}]
  %s2 = inlined_call_operand.vmem [shape: f32[4,36], index: 2, kind: input, shape index: {}]
  %s3 = inlined_call_operand.vmem [shape: f32[9,256], index: 3, kind: input, shape index: {}]
  %s4 = inlined_call_operand.vmem [shape: f32[2,4,256], index: 4, kind: output, shape index: {}]
  %s5 = sld [smem:[#allocation0]]
  $region26: #{basic_block_forward.1} parent=0
    _
  %s7 = ssub.s32 1, %s5
  %s8 = scalar_select 0, %s7, %s5
  // Predicated region
  $region2: #{basic_block_forward.1} parent=0 // pred_check
    _
  $region3: #{basic_block_forward.1} parent=0 // pred_check_branch
    %10 = sbr.rel (0) target = $region5
  $region4: #{basic_block_forward.1} parent=0 // pred_region
    _
  $region5: #{basic_block_forward.1} parent=0 // pred_fallthru
    _
  // Predicated region
  $region6: #{basic_block_forward.1} parent=0 // pred_check
    _
  $region7: #{basic_block_forward.1} parent=0 // pred_check_branch
    %12 = sbr.rel (0) target = $region9
  $region8: #{basic_block_forward.1} parent=0 // pred_region
    _
  $region9: #{basic_block_forward.1} parent=0 // pred_fallthru
    _
  // Predicated region
  $region10: #{basic_block_forward.1} parent=0 // pred_check
    _
  $region11: #{basic_block_forward.1} parent=0 // pred_check_branch
    %14 = sbr.rel (0) target = $region13
  $region12: #{basic_block_forward.1} parent=0 // pred_region
    _
  $region13: #{basic_block_forward.1} parent=0 // pred_fallthru
    _
  // Predicated region
  $region14: #{basic_block_forward.1} parent=0 // pred_check
    _
  $region15: #{basic_block_forward.1} parent=0 // pred_check_branch
    %16 = sbr.rel (0) target = $region17
  $region16: #{basic_block_forward.1} parent=0 // pred_region
    _
  $region17: #{basic_block_forward.1} parent=0 // pred_fallthru
    _
  %17 = vst [vmem:[#allocation2] sm:$0xf] 0.0
  %18 = vst [vmem:[#allocation2 + $0xc] sm:$0xf] 0.0
  %v19 = vld [vmem:[%s0] sm:$0xff]
  %20 = vst [vmem:[#allocation2 + $0x4] sm:$0xff] %v19
  %v21 = vld [vmem:[#allocation2] sm:$0xff]
  %v22 = vld [vmem:[#allocation2 + $0x8] sm:$0xf]
  %v23 = vld [vmem:[%s3] ss:$8 sm:$0x3]
  %v25 = vlaneseq
  %v26 = vshrl.u32 %v25, 7
  %v27 = vsub.s32 0, %v26
  %v28 = vrot.slane %v23, %v27
  %v29 = vlaneseq
  %v30 = vshrl.u32 %v29, 7
  %v31 = vsub.s32 1, %v30
  %v32 = vrot.slane %v23, %v31
  %v33 = vcombine.low %v28, %v32
  %34 = vrot.lane.b32.xlu0 %v33, 110
  %v35 = vpop.permute.xlu0 %34
  %v36 = vrot.slane %v35, 4
  %vm37 = vcmask 900096
  %v38 = vsel %vm37, %v36, %v35
  %v41 = vmul.f32 %v21, %v38
  %v42 = vmul.f32 %v22, %v36
  %v45 = vcombine.high %v41, %v41
  %46 = vrot.lane.b32.xlu0 %v41, 18
  %v47 = vpop.permute.xlu0 %46
  %48 = vrot.lane.b32.xlu0 %v45, 18
  %v49 = vpop.permute.xlu0 %48
  %50 = vrot.lane.b32.xlu0 %v42, 18
  %v51 = vpop.permute.xlu0 %50
  %vm52 = vcmask 146432
  %v53 = vsel %vm52, %v47, %v49
  %v54 = vsel %vm52, %v49, %v51
  %57 = vst [vmem:[#allocation3] sm:$0xf] %v53
  %58 = vst [vmem:[#allocation3 + $0x8] sm:$0xf] %v54
  %v59 = vld [vmem:[#allocation2] sm:$0xff]
  %v60 = vld [vmem:[#allocation2 + $0x8] sm:$0xf]
  %s61 = scalar_lea.vmem %s3, 1
  %v62 = vld [vmem:[%s61] ss:$8 sm:$0x3]
  %v64 = vlaneseq
  %v65 = vshrl.u32 %v64, 7
  %v66 = vsub.s32 0, %v65
  %v67 = vrot.slane %v62, %v66
  %v68 = vlaneseq
  %v69 = vshrl.u32 %v68, 7
  %v70 = vsub.s32 1, %v69
  %v71 = vrot.slane %v62, %v70
  %v72 = vcombine.low %v67, %v71
  %73 = vrot.lane.b32.xlu0 %v72, 111
  %v74 = vpop.permute.xlu0 %73
  %v75 = vrot.slane %v74, 4
  %vm76 = vcmask 908288
  %v77 = vsel %vm76, %v75, %v74
  %v80 = vmul.f32 %v59, %v77
  %v81 = vmul.f32 %v60, %v75
  %v84 = vcombine.low %v80, %v80
  %v85 = vcombine.low %v81, %v81
  %86 = vrot.lane.b32.xlu0 %v84, 17
  %v87 = vpop.permute.xlu0 %86
  %88 = vrot.lane.b32.xlu0 %v80, 17
  %v89 = vpop.permute.xlu0 %88
  %90 = vrot.lane.b32.xlu0 %v85, 17
  %v91 = vpop.permute.xlu0 %90
  %vm92 = vcmask 138240
  %v93 = vsel %vm92, %v87, %v89
  %v94 = vsel %vm92, %v89, %v91
  %97 = vst [vmem:[#allocation3] sm:$0xf0] %v93
  %98 = vst [vmem:[#allocation3 + $0x8] sm:$0xf0] %v94
  %v99 = vld [vmem:[#allocation2] sm:$0xff]
  %v100 = vld [vmem:[#allocation2 + $0x8] sm:$0xf]
  %s101 = scalar_lea.vmem %s3, 2
  %v102 = vld [vmem:[%s101] ss:$8 sm:$0x3]
  %v104 = vlaneseq
  %v105 = vshrl.u32 %v104, 7
  %v106 = vsub.s32 0, %v105
  %v107 = vrot.slane %v102, %v106
  %v108 = vlaneseq
  %v109 = vshrl.u32 %v108, 7
  %v110 = vsub.s32 1, %v109
  %v111 = vrot.slane %v102, %v110
  %v112 = vcombine.low %v107, %v111
  %113 = vrot.lane.b32.xlu0 %v112, 112
  %v114 = vpop.permute.xlu0 %113
  %v115 = vrot.slane %v114, 4
  %vm116 = vcmask 916480
  %v117 = vsel %vm116, %v115, %v114
  %v120 = vmul.f32 %v99, %v117
  %v121 = vmul.f32 %v100, %v115
  %v124 = vcombine.high %v120, %v120
  %125 = vrot.lane.b32.xlu0 %v120, 16
  %v126 = vpop.permute.xlu0 %125
  %127 = vrot.lane.b32.xlu0 %v124, 16
  %v128 = vpop.permute.xlu0 %127
  %129 = vrot.lane.b32.xlu0 %v121, 16
  %v130 = vpop.permute.xlu0 %129
  %vm131 = vcmask 130048
  %v132 = vsel %vm131, %v126, %v128
  %v133 = vsel %vm131, %v128, %v130
  %136 = vst [vmem:[#allocation3 + $0x20] sm:$0xf] %v132
  %137 = vst [vmem:[#allocation3 + $0x28] sm:$0xf] %v133
  %v138 = vld [vmem:[#allocation2] sm:$0xff]
  %v139 = vld [vmem:[#allocation2 + $0x8] sm:$0xf]
  %s140 = scalar_lea.vmem %s3, 3
  %v141 = vld [vmem:[%s140] ss:$8 sm:$0x3]
  %v143 = vlaneseq
  %v144 = vshrl.u32 %v143, 7
  %v145 = vsub.s32 0, %v144
  %v146 = vrot.slane %v141, %v145
  %v147 = vlaneseq
  %v148 = vshrl.u32 %v147, 7
  %v149 = vsub.s32 1, %v148
  %v150 = vrot.slane %v141, %v149
  %v151 = vcombine.low %v146, %v150
  %152 = vrot.lane.b32.xlu0 %v151, 126
  %v153 = vpop.permute.xlu0 %152
  %v154 = vrot.slane %v153, 4
  %vm155 = vcmask 1031168
  %v156 = vsel %vm155, %v154, %v153
  %v159 = vmul.f32 %v138, %v156
  %v160 = vmul.f32 %v139, %v154
  %v163 = vcombine.low %v159, %v159
  %v164 = vcombine.low %v160, %v160
  %165 = vrot.lane.b32.xlu0 %v163, 2
  %v166 = vpop.permute.xlu0 %165
  %167 = vrot.lane.b32.xlu0 %v159, 2
  %v168 = vpop.permute.xlu0 %167
  %169 = vrot.lane.b32.xlu0 %v164, 2
  %v170 = vpop.permute.xlu0 %169
  %vm171 = vcmask 15360
  %v172 = vsel %vm171, %v166, %v168
  %v173 = vsel %vm171, %v168, %v170
  %176 = vst [vmem:[#allocation3 + $0x20] sm:$0xf0] %v172
  %177 = vst [vmem:[#allocation3 + $0x28] sm:$0xf0] %v173
  %v178 = vld [vmem:[#allocation2] sm:$0xff]
  %v179 = vld [vmem:[#allocation2 + $0x8] sm:$0xf]
  %s180 = scalar_lea.vmem %s3, 4
  %v181 = vld [vmem:[%s180] ss:$8 sm:$0x3]
  %v183 = vlaneseq
  %v184 = vshrl.u32 %v183, 7
  %v185 = vsub.s32 0, %v184
  %v186 = vrot.slane %v181, %v185
  %v187 = vlaneseq
  %v188 = vshrl.u32 %v187, 7
  %v189 = vsub.s32 1, %v188
  %v190 = vrot.slane %v181, %v189
  %v191 = vcombine.low %v186, %v190
  %192 = vrot.lane.b32.xlu0 %v191, 127
  %v193 = vpop.permute.xlu0 %192
  %v194 = vrot.slane %v193, 4
  %vm195 = vcmask 1039360
  %v196 = vsel %vm195, %v194, %v193
  %v199 = vmul.f32 %v178, %v196
  %v200 = vmul.f32 %v179, %v194
  %v203 = vcombine.high %v199, %v199
  %204 = vrot.lane.b32.xlu0 %v199, 1
  %v205 = vpop.permute.xlu0 %204
  %206 = vrot.lane.b32.xlu0 %v203, 1
  %v207 = vpop.permute.xlu0 %206
  %208 = vrot.lane.b32.xlu0 %v200, 1
  %v209 = vpop.permute.xlu0 %208
  %vm210 = vcmask 7168
  %v211 = vsel %vm210, %v205, %v207
  %v212 = vsel %vm210, %v207, %v209
  %215 = vst [vmem:[#allocation3 + $0x40] sm:$0xf] %v211
  %216 = vst [vmem:[#allocation3 + $0x48] sm:$0xf] %v212
  %v217 = vld [vmem:[#allocation2 + $0x4] sm:$0xff]
  %s218 = scalar_lea.vmem %s3, 5
  %v219 = vld [vmem:[%s218] ss:$8 sm:$0x3]
  %v221 = vlaneseq
  %v222 = vshrl.u32 %v221, 7
  %v223 = vsub.s32 0, %v222
  %v224 = vrot.slane %v219, %v223
  %v225 = vlaneseq
  %v226 = vshrl.u32 %v225, 7
  %v227 = vsub.s32 1, %v226
  %v228 = vrot.slane %v219, %v227
  %v229 = vcombine.low %v224, %v228
  %v231 = vmul.f32 %v217, %v229
  %v233 = vcombine.low %v231, %v231
  %235 = vst [vmem:[#allocation3 + $0x40] sm:$0xf0] %v233
  %236 = vst [vmem:[#allocation3 + $0x48] sm:$0xf0] %v231
  %v237 = vld [vmem:[#allocation2 + $0x4] sm:$0xff]
  %v238 = vld [vmem:[#allocation2 + $0xc] sm:$0xf]
  %s239 = scalar_lea.vmem %s3, 6
  %v240 = vld [vmem:[%s239] ss:$8 sm:$0x3]
  %v242 = vlaneseq
  %v243 = vshrl.u32 %v242, 7
  %v244 = vsub.s32 0, %v243
  %v245 = vrot.slane %v240, %v244
  %v246 = vlaneseq
  %v247 = vshrl.u32 %v246, 7
  %v248 = vsub.s32 1, %v247
  %v249 = vrot.slane %v240, %v248
  %v250 = vcombine.low %v245, %v249
  %251 = vrot.lane.b32.xlu0 %v250, 14
  %v252 = vpop.permute.xlu0 %251
  %v253 = vrot.slane %v252, 4
  %vm254 = vcmask 113664
  %v255 = vsel %vm254, %v253, %v252
  %v258 = vmul.f32 %v237, %v255
  %v259 = vmul.f32 %v238, %v253
  %v262 = vcombine.high %v258, %v258
  %263 = vrot.lane.b32.xlu0 %v258, 114
  %v264 = vpop.permute.xlu0 %263
  %265 = vrot.lane.b32.xlu0 %v262, 114
  %v266 = vpop.permute.xlu0 %265
  %267 = vrot.lane.b32.xlu0 %v259, 114
  %v268 = vpop.permute.xlu0 %267
  %vm269 = vcmask 932864
  %v270 = vsel %vm269, %v264, %v266
  %v271 = vsel %vm269, %v266, %v268
  %274 = vst [vmem:[#allocation3 + $0x60] sm:$0xf] %v270
  %275 = vst [vmem:[#allocation3 + $0x68] sm:$0xf] %v271
  %v276 = vld [vmem:[#allocation2 + $0x4] sm:$0xff]
  %v277 = vld [vmem:[#allocation2 + $0xc] sm:$0xf]
  %s278 = scalar_lea.vmem %s3, 7
  %v279 = vld [vmem:[%s278] ss:$8 sm:$0x3]
  %v281 = vlaneseq
  %v282 = vshrl.u32 %v281, 7
  %v283 = vsub.s32 0, %v282
  %v284 = vrot.slane %v279, %v283
  %v285 = vlaneseq
  %v286 = vshrl.u32 %v285, 7
  %v287 = vsub.s32 1, %v286
  %v288 = vrot.slane %v279, %v287
  %v289 = vcombine.low %v284, %v288
  %290 = vrot.lane.b32.xlu0 %v289, 15
  %v291 = vpop.permute.xlu0 %290
  %v292 = vrot.slane %v291, 4
  %vm293 = vcmask 121856
  %v294 = vsel %vm293, %v292, %v291
  %v297 = vmul.f32 %v276, %v294
  %v298 = vmul.f32 %v277, %v292
  %v301 = vcombine.low %v297, %v297
  %v302 = vcombine.low %v298, %v298
  %303 = vrot.lane.b32.xlu0 %v301, 113
  %v304 = vpop.permute.xlu0 %303
  %305 = vrot.lane.b32.xlu0 %v297, 113
  %v306 = vpop.permute.xlu0 %305
  %307 = vrot.lane.b32.xlu0 %v302, 113
  %v308 = vpop.permute.xlu0 %307
  %vm309 = vcmask 924672
  %v310 = vsel %vm309, %v304, %v306
  %v311 = vsel %vm309, %v306, %v308
  %314 = vst [vmem:[#allocation3 + $0x60] sm:$0xf0] %v310
  %315 = vst [vmem:[#allocation3 + $0x68] sm:$0xf0] %v311
  %v316 = vld [vmem:[#allocation2 + $0x4] sm:$0xff]
  %v317 = vld [vmem:[#allocation2 + $0xc] sm:$0xf]
  %s318 = scalar_lea.vmem %s3, 16
  %v319 = vld [vmem:[%s318] ss:$8 sm:$0x3]
  %v321 = vlaneseq
  %v322 = vshrl.u32 %v321, 7
  %v323 = vsub.s32 0, %v322
  %v324 = vrot.slane %v319, %v323
  %v325 = vlaneseq
  %v326 = vshrl.u32 %v325, 7
  %v327 = vsub.s32 1, %v326
  %v328 = vrot.slane %v319, %v327
  %v329 = vcombine.low %v324, %v328
  %330 = vrot.lane.b32.xlu0 %v329, 16
  %v331 = vpop.permute.xlu0 %330
  %v332 = vrot.slane %v331, 4
  %v333 = vsel %vm131, %v332, %v331
  %v336 = vmul.f32 %v316, %v333
  %v337 = vmul.f32 %v317, %v332
  %v340 = vcombine.high %v336, %v336
  %341 = vrot.lane.b32.xlu0 %v336, 112
  %v342 = vpop.permute.xlu0 %341
  %343 = vrot.lane.b32.xlu0 %v340, 112
  %v344 = vpop.permute.xlu0 %343
  %345 = vrot.lane.b32.xlu0 %v337, 112
  %v346 = vpop.permute.xlu0 %345
  %v347 = vsel %vm116, %v342, %v344
  %v348 = vsel %vm116, %v344, %v346
  %351 = vst [vmem:[#allocation3 + $0x80] sm:$0xf] %v347
  %352 = vst [vmem:[#allocation3 + $0x88] sm:$0xf] %v348
  %s353 = scalar_lea.vmem %s0, 8
  %v354 = vld [vmem:[%s353] sm:$0xff]
  %355 = vst [vmem:[#allocation2 + $0x4] sm:$0xff] %v354
  %v356 = vld [vmem:[#allocation2] sm:$0xff]
  %v357 = vld [vmem:[#allocation2 + $0x8] sm:$0xf]
  %v358 = vld [vmem:[%s3] ss:$8 sm:$0x3]
  %v360 = vlaneseq
  %v361 = vshrl.u32 %v360, 7
  %v362 = vsub.s32 0, %v361
  %v363 = vrot.slane %v358, %v362
  %v364 = vlaneseq
  %v365 = vshrl.u32 %v364, 7
  %v366 = vsub.s32 1, %v365
  %v367 = vrot.slane %v358, %v366
  %v368 = vcombine.low %v363, %v367
  %369 = vrot.lane.b32.xlu0 %v368, 110
  %v370 = vpop.permute.xlu0 %369
  %v371 = vrot.slane %v370, 4
  %v372 = vsel %vm37, %v371, %v370
  %v375 = vmul.f32 %v356, %v372
  %v376 = vmul.f32 %v357, %v371
  %v379 = vcombine.high %v375, %v375
  %380 = vrot.lane.b32.xlu0 %v375, 18
  %v381 = vpop.permute.xlu0 %380
  %382 = vrot.lane.b32.xlu0 %v379, 18
  %v383 = vpop.permute.xlu0 %382
  %384 = vrot.lane.b32.xlu0 %v376, 18
  %v385 = vpop.permute.xlu0 %384
  %v386 = vsel %vm52, %v381, %v383
  %v387 = vsel %vm52, %v383, %v385
  %390 = vst [vmem:[#allocation3 + $0x10] sm:$0xf] %v386
  %391 = vst [vmem:[#allocation3 + $0x18] sm:$0xf] %v387
  %v392 = vld [vmem:[#allocation2] sm:$0xff]
  %v393 = vld [vmem:[#allocation2 + $0x8] sm:$0xf]
  %v394 = vld [vmem:[%s61] ss:$8 sm:$0x3]
  %v396 = vlaneseq
  %v397 = vshrl.u32 %v396, 7
  %v398 = vsub.s32 0, %v397
  %v399 = vrot.slane %v394, %v398
  %v400 = vlaneseq
  %v401 = vshrl.u32 %v400, 7
  %v402 = vsub.s32 1, %v401
  %v403 = vrot.slane %v394, %v402
  %v404 = vcombine.low %v399, %v403
  %405 = vrot.lane.b32.xlu0 %v404, 111
  %v406 = vpop.permute.xlu0 %405
  %v407 = vrot.slane %v406, 4
  %v408 = vsel %vm76, %v407, %v406
  %v411 = vmul.f32 %v392, %v408
  %v412 = vmul.f32 %v393, %v407
  %v415 = vcombine.low %v411, %v411
  %v416 = vcombine.low %v412, %v412
  %417 = vrot.lane.b32.xlu0 %v415, 17
  %v418 = vpop.permute.xlu0 %417
  %419 = vrot.lane.b32.xlu0 %v411, 17
  %v420 = vpop.permute.xlu0 %419
  %421 = vrot.lane.b32.xlu0 %v416, 17
  %v422 = vpop.permute.xlu0 %421
  %v423 = vsel %vm92, %v418, %v420
  %v424 = vsel %vm92, %v420, %v422
  %427 = vst [vmem:[#allocation3 + $0x10] sm:$0xf0] %v423
  %428 = vst [vmem:[#allocation3 + $0x18] sm:$0xf0] %v424
  %v429 = vld [vmem:[#allocation2] sm:$0xff]
  %v430 = vld [vmem:[#allocation2 + $0x8] sm:$0xf]
  %v431 = vld [vmem:[%s101] ss:$8 sm:$0x3]
  %v433 = vlaneseq
  %v434 = vshrl.u32 %v433, 7
  %v435 = vsub.s32 0, %v434
  %v436 = vrot.slane %v431, %v435
  %v437 = vlaneseq
  %v438 = vshrl.u32 %v437, 7
  %v439 = vsub.s32 1, %v438
  %v440 = vrot.slane %v431, %v439
  %v441 = vcombine.low %v436, %v440
  %442 = vrot.lane.b32.xlu0 %v441, 112
  %v443 = vpop.permute.xlu0 %442
  %v444 = vrot.slane %v443, 4
  %v445 = vsel %vm116, %v444, %v443
  %v448 = vmul.f32 %v429, %v445
  %v449 = vmul.f32 %v430, %v444
  %v452 = vcombine.high %v448, %v448
  %453 = vrot.lane.b32.xlu0 %v448, 16
  %v454 = vpop.permute.xlu0 %453
  %455 = vrot.lane.b32.xlu0 %v452, 16
  %v456 = vpop.permute.xlu0 %455
  %457 = vrot.lane.b32.xlu0 %v449, 16
  %v458 = vpop.permute.xlu0 %457
  %v459 = vsel %vm131, %v454, %v456
  %v460 = vsel %vm131, %v456, %v458
  %463 = vst [vmem:[#allocation3 + $0x30] sm:$0xf] %v459
  %464 = vst [vmem:[#allocation3 + $0x38] sm:$0xf] %v460
  %v465 = vld [vmem:[#allocation2] sm:$0xff]
  %v466 = vld [vmem:[#allocation2 + $0x8] sm:$0xf]
  %v467 = vld [vmem:[%s140] ss:$8 sm:$0x3]
  %v469 = vlaneseq
  %v470 = vshrl.u32 %v469, 7
  %v471 = vsub.s32 0, %v470
  %v472 = vrot.slane %v467, %v471
  %v473 = vlaneseq
  %v474 = vshrl.u32 %v473, 7
  %v475 = vsub.s32 1, %v474
  %v476 = vrot.slane %v467, %v475
  %v477 = vcombine.low %v472, %v476
  %478 = vrot.lane.b32.xlu0 %v477, 126
  %v479 = vpop.permute.xlu0 %478
  %v480 = vrot.slane %v479, 4
  %v481 = vsel %vm155, %v480, %v479
  %v484 = vmul.f32 %v465, %v481
  %v485 = vmul.f32 %v466, %v480
  %v488 = vcombine.low %v484, %v484
  %v489 = vcombine.low %v485, %v485
  %490 = vrot.lane.b32.xlu0 %v488, 2
  %v491 = vpop.permute.xlu0 %490
  %492 = vrot.lane.b32.xlu0 %v484, 2
  %v493 = vpop.permute.xlu0 %492
  %494 = vrot.lane.b32.xlu0 %v489, 2
  %v495 = vpop.permute.xlu0 %494
  %v496 = vsel %vm171, %v491, %v493
  %v497 = vsel %vm171, %v493, %v495
  %500 = vst [vmem:[#allocation3 + $0x30] sm:$0xf0] %v496
  %501 = vst [vmem:[#allocation3 + $0x38] sm:$0xf0] %v497
  %v502 = vld [vmem:[#allocation2] sm:$0xff]
  %v503 = vld [vmem:[#allocation2 + $0x8] sm:$0xf]
  %v504 = vld [vmem:[%s180] ss:$8 sm:$0x3]
  %v506 = vlaneseq
  %v507 = vshrl.u32 %v506, 7
  %v508 = vsub.s32 0, %v507
  %v509 = vrot.slane %v504, %v508
  %v510 = vlaneseq
  %v511 = vshrl.u32 %v510, 7
  %v512 = vsub.s32 1, %v511
  %v513 = vrot.slane %v504, %v512
  %v514 = vcombine.low %v509, %v513
  %515 = vrot.lane.b32.xlu0 %v514, 127
  %v516 = vpop.permute.xlu0 %515
  %v517 = vrot.slane %v516, 4
  %v518 = vsel %vm195, %v517, %v516
  %v521 = vmul.f32 %v502, %v518
  %v522 = vmul.f32 %v503, %v517
  %v525 = vcombine.high %v521, %v521
  %526 = vrot.lane.b32.xlu0 %v521, 1
  %v527 = vpop.permute.xlu0 %526
  %528 = vrot.lane.b32.xlu0 %v525, 1
  %v529 = vpop.permute.xlu0 %528
  %530 = vrot.lane.b32.xlu0 %v522, 1
  %v531 = vpop.permute.xlu0 %530
  %v532 = vsel %vm210, %v527, %v529
  %v533 = vsel %vm210, %v529, %v531
  %536 = vst [vmem:[#allocation3 + $0x50] sm:$0xf] %v532
  %537 = vst [vmem:[#allocation3 + $0x58] sm:$0xf] %v533
  %v538 = vld [vmem:[#allocation2 + $0x4] sm:$0xff]
  %v539 = vld [vmem:[%s218] ss:$8 sm:$0x3]
  %v541 = vlaneseq
  %v542 = vshrl.u32 %v541, 7
  %v543 = vsub.s32 0, %v542
  %v544 = vrot.slane %v539, %v543
  %v545 = vlaneseq
  %v546 = vshrl.u32 %v545, 7
  %v547 = vsub.s32 1, %v546
  %v548 = vrot.slane %v539, %v547
  %v549 = vcombine.low %v544, %v548
  %v551 = vmul.f32 %v538, %v549
  %v553 = vcombine.low %v551, %v551
  %555 = vst [vmem:[#allocation3 + $0x50] sm:$0xf0] %v553
  %556 = vst [vmem:[#allocation3 + $0x58] sm:$0xf0] %v551
  %v557 = vld [vmem:[#allocation2 + $0x4] sm:$0xff]
  %v558 = vld [vmem:[#allocation2 + $0xc] sm:$0xf]
  %v559 = vld [vmem:[%s239] ss:$8 sm:$0x3]
  %v561 = vlaneseq
  %v562 = vshrl.u32 %v561, 7
  %v563 = vsub.s32 0, %v562
  %v564 = vrot.slane %v559, %v563
  %v565 = vlaneseq
  %v566 = vshrl.u32 %v565, 7
  %v567 = vsub.s32 1, %v566
  %v568 = vrot.slane %v559, %v567
  %v569 = vcombine.low %v564, %v568
  %570 = vrot.lane.b32.xlu0 %v569, 14
  %v571 = vpop.permute.xlu0 %570
  %v572 = vrot.slane %v571, 4
  %v573 = vsel %vm254, %v572, %v571
  %v576 = vmul.f32 %v557, %v573
  %v577 = vmul.f32 %v558, %v572
  %v580 = vcombine.high %v576, %v576
  %581 = vrot.lane.b32.xlu0 %v576, 114
  %v582 = vpop.permute.xlu0 %581
  %583 = vrot.lane.b32.xlu0 %v580, 114
  %v584 = vpop.permute.xlu0 %583
  %585 = vrot.lane.b32.xlu0 %v577, 114
  %v586 = vpop.permute.xlu0 %585
  %v587 = vsel %vm269, %v582, %v584
  %v588 = vsel %vm269, %v584, %v586
  %591 = vst [vmem:[#allocation3 + $0x70] sm:$0xf] %v587
  %592 = vst [vmem:[#allocation3 + $0x78] sm:$0xf] %v588
  %v593 = vld [vmem:[#allocation2 + $0x4] sm:$0xff]
  %v594 = vld [vmem:[#allocation2 + $0xc] sm:$0xf]
  %v595 = vld [vmem:[%s278] ss:$8 sm:$0x3]
  %v597 = vlaneseq
  %v598 = vshrl.u32 %v597, 7
  %v599 = vsub.s32 0, %v598
  %v600 = vrot.slane %v595, %v599
  %v601 = vlaneseq
  %v602 = vshrl.u32 %v601, 7
  %v603 = vsub.s32 1, %v602
  %v604 = vrot.slane %v595, %v603
  %v605 = vcombine.low %v600, %v604
  %606 = vrot.lane.b32.xlu0 %v605, 15
  %v607 = vpop.permute.xlu0 %606
  %v608 = vrot.slane %v607, 4
  %v609 = vsel %vm293, %v608, %v607
  %v612 = vmul.f32 %v593, %v609
  %v613 = vmul.f32 %v594, %v608
  %v616 = vcombine.low %v612, %v612
  %v617 = vcombine.low %v613, %v613
  %618 = vrot.lane.b32.xlu0 %v616, 113
  %v619 = vpop.permute.xlu0 %618
  %620 = vrot.lane.b32.xlu0 %v612, 113
  %v621 = vpop.permute.xlu0 %620
  %622 = vrot.lane.b32.xlu0 %v617, 113
  %v623 = vpop.permute.xlu0 %622
  %v624 = vsel %vm309, %v619, %v621
  %v625 = vsel %vm309, %v621, %v623
  %628 = vst [vmem:[#allocation3 + $0x70] sm:$0xf0] %v624
  %629 = vst [vmem:[#allocation3 + $0x78] sm:$0xf0] %v625
  %v630 = vld [vmem:[#allocation2 + $0x4] sm:$0xff]
  %v631 = vld [vmem:[#allocation2 + $0xc] sm:$0xf]
  %v632 = vld [vmem:[%s318] ss:$8 sm:$0x3]
  %v634 = vlaneseq
  %v635 = vshrl.u32 %v634, 7
  %v636 = vsub.s32 0, %v635
  %v637 = vrot.slane %v632, %v636
  %v638 = vlaneseq
  %v639 = vshrl.u32 %v638, 7
  %v640 = vsub.s32 1, %v639
  %v641 = vrot.slane %v632, %v640
  %v642 = vcombine.low %v637, %v641
  %643 = vrot.lane.b32.xlu0 %v642, 16
  %v644 = vpop.permute.xlu0 %643
  %v645 = vrot.slane %v644, 4
  %v646 = vsel %vm131, %v645, %v644
  %v649 = vmul.f32 %v630, %v646
  %v650 = vmul.f32 %v631, %v645
  %v653 = vcombine.high %v649, %v649
  %654 = vrot.lane.b32.xlu0 %v649, 112
  %v655 = vpop.permute.xlu0 %654
  %656 = vrot.lane.b32.xlu0 %v653, 112
  %v657 = vpop.permute.xlu0 %656
  %658 = vrot.lane.b32.xlu0 %v650, 112
  %v659 = vpop.permute.xlu0 %658
  %v660 = vsel %vm116, %v655, %v657
  %v661 = vsel %vm116, %v657, %v659
  %664 = vst [vmem:[#allocation3 + $0x90] sm:$0xf] %v660
  %665 = vst [vmem:[#allocation3 + $0x98] sm:$0xf] %v661
  %v666 = vld [vmem:[%s1] sm:$0xf]
  %v667 = vld [vmem:[#allocation3] sm:$0xff]
  %v668 = vld [vmem:[#allocation3 + $0x8] sm:$0xff]
  %v669 = vld [vmem:[#allocation3 + $0x10] sm:$0xff]
  %v670 = vld [vmem:[#allocation3 + $0x18] sm:$0xff]
  %v671 = vld [vmem:[#allocation3 + $0x20] sm:$0xff]
  %v672 = vld [vmem:[#allocation3 + $0x28] sm:$0xff]
  %v673 = vld [vmem:[#allocation3 + $0x30] sm:$0xff]
  %v674 = vld [vmem:[#allocation3 + $0x38] sm:$0xff]
  %v675 = vld [vmem:[#allocation3 + $0x40] sm:$0xff]
  %v676 = vld [vmem:[#allocation3 + $0x48] sm:$0xff]
  %v677 = vld [vmem:[#allocation3 + $0x50] sm:$0xff]
  %v678 = vld [vmem:[#allocation3 + $0x58] sm:$0xff]
  %v679 = vld [vmem:[#allocation3 + $0x60] sm:$0xff]
  %v680 = vld [vmem:[#allocation3 + $0x68] sm:$0xff]
  %v681 = vld [vmem:[#allocation3 + $0x70] sm:$0xff]
  %v682 = vld [vmem:[#allocation3 + $0x78] sm:$0xff]
  %v683 = vld [vmem:[#allocation3 + $0x80] sm:$0xf]
  %v684 = vld [vmem:[#allocation3 + $0x88] sm:$0xf]
  %v685 = vld [vmem:[#allocation3 + $0x90] sm:$0xf]
  %v686 = vld [vmem:[#allocation3 + $0x98] sm:$0xf]
  %vm687 = vcmask 293888
  %v689 = vsel %vm687, %v666, 0
  %vm691 = vcmask 1043456
  %v693 = vsel %vm691, %v683, 0
  %v696 = vsel %vm691, %v684, 0
  %v699 = vsel %vm691, %v685, 0
  %v702 = vsel %vm691, %v686, 0
  %704 = vmatprep.subr.mxu0 %v668
  %705 = vmatpush1.msra.mxu0 %v667
  %706 = vmatprep.subr.mxu0 %v672
  %707 = vmatpush1.msra.mxu0 %v671
  %708 = vmatprep.subr.mxu0 %v676
  %709 = vmatpush1.msra.mxu0 %v675
  %710 = vmatprep.subr.mxu0 %v680
  %711 = vmatpush1.msra.mxu0 %v679
  %712 = vmatprep.subr.mxu0 %v696
  %713 = vmatpush1.msra.mxu0 %v693
  %714 = vmatprep.subr.mxu0 0.0
  %715 = vmatpush1.msra.mxu0 0.0
  %716 = vmatprep.subr.mxu0 0.0
  %717 = vmatpush1.msra.mxu0 0.0
  %718 = vmatprep.subr.mxu0 0.0
  %719 = vmatpush1.msra.mxu0 0.0
  %720 = vmatprep.subr.mxu0 0.0
  %721 = vmatpush1.msra.mxu0 0.0
  %722 = vmatprep.subr.mxu0 0.0
  %723 = vmatpush1.msra.mxu0 0.0
  %724 = vmatprep.subr.mxu0 0.0
  %725 = vmatpush1.msra.mxu0 0.0
  %726 = vmatprep.subr.mxu0 0.0
  %727 = vmatpush1.msra.mxu0 0.0
  %728 = vmatprep.subr.mxu0 0.0
  %729 = vmatpush1.msra.mxu0 0.0
  %730 = vmatprep.subr.mxu0 0.0
  %731 = vmatpush1.msra.mxu0 0.0
  %732 = vmatprep.subr.mxu0 0.0
  %733 = vmatpush1.msra.mxu0 0.0
  %734 = vmatprep.subr.mxu0 0.0
  %735 = vmatpush1.msra.mxu0 0.0
  %736 = vmatprep.subr.mxu0 0.0
  %737 = vmatpush1.msra.mxu0 0.0
  %738 = vmatprep.subr.mxu0 0.0
  %739 = vmatpush1.msra.mxu0 0.0
  %740 = vmatprep.subr.mxu0 0.0
  %741 = vmatpush1.msra.mxu0 0.0
  %742 = vmatprep.subr.mxu0 0.0
  %743 = vmatpush1.msra.mxu0 0.0
  %744 = vmatprep.subr.mxu0 0.0
  %745 = vmatpush1.msra.mxu0 0.0
  %746 = vmatprep.subr.mxu0 0.0
  %747 = vmatpush1.msra.mxu0 0.0
  %748 = vmatprep.subr.mxu0 0.0
  %749 = vmatpush1.msra.mxu0 0.0
  %750 = vmatprep.subr.mxu0 0.0
  %751 = vmatpush1.msra.mxu0 0.0
  %752 = vmatprep.subr.mxu0 0.0
  %753 = vmatpush1.msra.mxu0 0.0
  %754 = vmatprep.subr.mxu0 0.0
  %755 = vmatpush1.msra.mxu0 0.0
  %756 = vmatprep.subr.mxu0 0.0
  %757 = vmatpush1.msra.mxu0 0.0
  %758 = vmatprep.subr.mxu0 0.0
  %759 = vmatpush1.msra.mxu0 0.0
  %760 = vmatprep.subr.mxu0 0.0
  %761 = vmatpush1.msra.mxu0 0.0
  %762 = vmatprep.subr.mxu0 0.0
  %763 = vmatpush1.msra.mxu0 0.0
  %764 = vmatprep.subr.mxu0 0.0
  %765 = vmatpush1.msra.mxu0 0.0
  %766 = vmatprep.subr.mxu0 0.0
  %767 = vmatpush1.msra.mxu0 0.0
  %768 = vmatprep.mubr.f32.mxu0 0.0
  %769 = vmatmul.mubr.f32.gmra.mrb[0].mxu0 %v689
  %v770 = vpop.f32.mrb[0].mxu0
  %v771 = vadd.f32 0.0, %v770
  %v772 = vpop.f32.mrb[0].mxu0
  %v773 = vadd.f32 0.0, %v772
  %774 = vdwg.mxu0
  %775 = vmatprep.subr.mxu0 %v670
  %776 = vmatpush1.msra.mxu0 %v669
  %777 = vmatprep.subr.mxu0 %v674
  %778 = vmatpush1.msra.mxu0 %v673
  %779 = vmatprep.subr.mxu0 %v678
  %780 = vmatpush1.msra.mxu0 %v677
  %781 = vmatprep.subr.mxu0 %v682
  %782 = vmatpush1.msra.mxu0 %v681
  %783 = vmatprep.subr.mxu0 %v702
  %784 = vmatpush1.msra.mxu0 %v699
  %785 = vmatprep.subr.mxu0 0.0
  %786 = vmatpush1.msra.mxu0 0.0
  %787 = vmatprep.subr.mxu0 0.0
  %788 = vmatpush1.msra.mxu0 0.0
  %789 = vmatprep.subr.mxu0 0.0
  %790 = vmatpush1.msra.mxu0 0.0
  %791 = vmatprep.subr.mxu0 0.0
  %792 = vmatpush1.msra.mxu0 0.0
  %793 = vmatprep.subr.mxu0 0.0
  %794 = vmatpush1.msra.mxu0 0.0
  %795 = vmatprep.subr.mxu0 0.0
  %796 = vmatpush1.msra.mxu0 0.0
  %797 = vmatprep.subr.mxu0 0.0
  %798 = vmatpush1.msra.mxu0 0.0
  %799 = vmatprep.subr.mxu0 0.0
  %800 = vmatpush1.msra.mxu0 0.0
  %801 = vmatprep.subr.mxu0 0.0
  %802 = vmatpush1.msra.mxu0 0.0
  %803 = vmatprep.subr.mxu0 0.0
  %804 = vmatpush1.msra.mxu0 0.0
  %805 = vmatprep.subr.mxu0 0.0
  %806 = vmatpush1.msra.mxu0 0.0
  %807 = vmatprep.subr.mxu0 0.0
  %808 = vmatpush1.msra.mxu0 0.0
  %809 = vmatprep.subr.mxu0 0.0
  %810 = vmatpush1.msra.mxu0 0.0
  %811 = vmatprep.subr.mxu0 0.0
  %812 = vmatpush1.msra.mxu0 0.0
  %813 = vmatprep.subr.mxu0 0.0
  %814 = vmatpush1.msra.mxu0 0.0
  %815 = vmatprep.subr.mxu0 0.0
  %816 = vmatpush1.msra.mxu0 0.0
  %817 = vmatprep.subr.mxu0 0.0
  %818 = vmatpush1.msra.mxu0 0.0
  %819 = vmatprep.subr.mxu0 0.0
  %820 = vmatpush1.msra.mxu0 0.0
  %821 = vmatprep.subr.mxu0 0.0
  %822 = vmatpush1.msra.mxu0 0.0
  %823 = vmatprep.subr.mxu0 0.0
  %824 = vmatpush1.msra.mxu0 0.0
  %825 = vmatprep.subr.mxu0 0.0
  %826 = vmatpush1.msra.mxu0 0.0
  %827 = vmatprep.subr.mxu0 0.0
  %828 = vmatpush1.msra.mxu0 0.0
  %829 = vmatprep.subr.mxu0 0.0
  %830 = vmatpush1.msra.mxu0 0.0
  %831 = vmatprep.subr.mxu0 0.0
  %832 = vmatpush1.msra.mxu0 0.0
  %833 = vmatprep.subr.mxu0 0.0
  %834 = vmatpush1.msra.mxu0 0.0
  %835 = vmatprep.subr.mxu0 0.0
  %836 = vmatpush1.msra.mxu0 0.0
  %837 = vmatprep.subr.mxu0 0.0
  %838 = vmatpush1.msra.mxu0 0.0
  %839 = vmatprep.mubr.f32.mxu0 0.0
  %840 = vmatmul.mubr.f32.gmra.mrb[0].mxu0 %v689
  %v841 = vpop.f32.mrb[0].mxu0
  %v842 = vadd.f32 0.0, %v841
  %v843 = vpop.f32.mrb[0].mxu0
  %v844 = vadd.f32 0.0, %v843
  %845 = vdwg.mxu0
  %v846 = vmax.f32 %v771, 0.0
  %v847 = vmax.f32 %v773, 0.0
  %v848 = vmax.f32 %v842, 0.0
  %v849 = vmax.f32 %v844, 0.0
  %v852 = vcombine.low %v846, %v847
  %854 = vst [vmem:[#allocation2 + $0x4] sm:$0xff] %v852
  %v855 = vld [vmem:[#allocation2] sm:$0xff]
  %v856 = vld [vmem:[#allocation2 + $0x8] sm:$0xf]
  %v857 = vld [vmem:[%s3] ss:$8 sm:$0x3]
  %v859 = vlaneseq
  %v860 = vshrl.u32 %v859, 7
  %v861 = vsub.s32 0, %v860
  %v862 = vrot.slane %v857, %v861
  %v863 = vlaneseq
  %v864 = vshrl.u32 %v863, 7
  %v865 = vsub.s32 1, %v864
  %v866 = vrot.slane %v857, %v865
  %v867 = vcombine.low %v862, %v866
  %868 = vrot.lane.b32.xlu0 %v867, 110
  %v869 = vpop.permute.xlu0 %868
  %v870 = vrot.slane %v869, 4
  %v871 = vsel %vm37, %v870, %v869
  %v874 = vmul.f32 %v855, %v871
  %v875 = vmul.f32 %v856, %v870
  %v878 = vcombine.high %v874, %v874
  %879 = vrot.lane.b32.xlu0 %v874, 18
  %v880 = vpop.permute.xlu0 %879
  %881 = vrot.lane.b32.xlu0 %v878, 18
  %v882 = vpop.permute.xlu0 %881
  %883 = vrot.lane.b32.xlu0 %v875, 18
  %v884 = vpop.permute.xlu0 %883
  %v885 = vsel %vm52, %v880, %v882
  %v886 = vsel %vm52, %v882, %v884
  %889 = vst [vmem:[#allocation3] sm:$0xf] %v885
  %890 = vst [vmem:[#allocation3 + $0x8] sm:$0xf] %v886
  %v891 = vld [vmem:[#allocation2] sm:$0xff]
  %v892 = vld [vmem:[#allocation2 + $0x8] sm:$0xf]
  %v893 = vld [vmem:[%s61] ss:$8 sm:$0x3]
  %v895 = vlaneseq
  %v896 = vshrl.u32 %v895, 7
  %v897 = vsub.s32 0, %v896
  %v898 = vrot.slane %v893, %v897
  %v899 = vlaneseq
  %v900 = vshrl.u32 %v899, 7
  %v901 = vsub.s32 1, %v900
  %v902 = vrot.slane %v893, %v901
  %v903 = vcombine.low %v898, %v902
  %904 = vrot.lane.b32.xlu0 %v903, 111
  %v905 = vpop.permute.xlu0 %904
  %v906 = vrot.slane %v905, 4
  %v907 = vsel %vm76, %v906, %v905
  %v910 = vmul.f32 %v891, %v907
  %v911 = vmul.f32 %v892, %v906
  %v914 = vcombine.low %v910, %v910
  %v915 = vcombine.low %v911, %v911
  %916 = vrot.lane.b32.xlu0 %v914, 17
  %v917 = vpop.permute.xlu0 %916
  %918 = vrot.lane.b32.xlu0 %v910, 17
  %v919 = vpop.permute.xlu0 %918
  %920 = vrot.lane.b32.xlu0 %v915, 17
  %v921 = vpop.permute.xlu0 %920
  %v922 = vsel %vm92, %v917, %v919
  %v923 = vsel %vm92, %v919, %v921
  %926 = vst [vmem:[#allocation3] sm:$0xf0] %v922
  %927 = vst [vmem:[#allocation3 + $0x8] sm:$0xf0] %v923
  %v928 = vld [vmem:[#allocation2] sm:$0xff]
  %v929 = vld [vmem:[#allocation2 + $0x8] sm:$0xf]
  %v930 = vld [vmem:[%s101] ss:$8 sm:$0x3]
  %v932 = vlaneseq
  %v933 = vshrl.u32 %v932, 7
  %v934 = vsub.s32 0, %v933
  %v935 = vrot.slane %v930, %v934
  %v936 = vlaneseq
  %v937 = vshrl.u32 %v936, 7
  %v938 = vsub.s32 1, %v937
  %v939 = vrot.slane %v930, %v938
  %v940 = vcombine.low %v935, %v939
  %941 = vrot.lane.b32.xlu0 %v940, 112
  %v942 = vpop.permute.xlu0 %941
  %v943 = vrot.slane %v942, 4
  %v944 = vsel %vm116, %v943, %v942
  %v947 = vmul.f32 %v928, %v944
  %v948 = vmul.f32 %v929, %v943
  %v951 = vcombine.high %v947, %v947
  %952 = vrot.lane.b32.xlu0 %v947, 16
  %v953 = vpop.permute.xlu0 %952
  %954 = vrot.lane.b32.xlu0 %v951, 16
  %v955 = vpop.permute.xlu0 %954
  %956 = vrot.lane.b32.xlu0 %v948, 16
  %v957 = vpop.permute.xlu0 %956
  %v958 = vsel %vm131, %v953, %v955
  %v959 = vsel %vm131, %v955, %v957
  %962 = vst [vmem:[#allocation3 + $0x20] sm:$0xf] %v958
  %963 = vst [vmem:[#allocation3 + $0x28] sm:$0xf] %v959
  %v964 = vld [vmem:[#allocation2] sm:$0xff]
  %v965 = vld [vmem:[#allocation2 + $0x8] sm:$0xf]
  %v966 = vld [vmem:[%s140] ss:$8 sm:$0x3]
  %v968 = vlaneseq
  %v969 = vshrl.u32 %v968, 7
  %v970 = vsub.s32 0, %v969
  %v971 = vrot.slane %v966, %v970
  %v972 = vlaneseq
  %v973 = vshrl.u32 %v972, 7
  %v974 = vsub.s32 1, %v973
  %v975 = vrot.slane %v966, %v974
  %v976 = vcombine.low %v971, %v975
  %977 = vrot.lane.b32.xlu0 %v976, 126
  %v978 = vpop.permute.xlu0 %977
  %v979 = vrot.slane %v978, 4
  %v980 = vsel %vm155, %v979, %v978
  %v983 = vmul.f32 %v964, %v980
  %v984 = vmul.f32 %v965, %v979
  %v987 = vcombine.low %v983, %v983
  %v988 = vcombine.low %v984, %v984
  %989 = vrot.lane.b32.xlu0 %v987, 2
  %v990 = vpop.permute.xlu0 %989
  %991 = vrot.lane.b32.xlu0 %v983, 2
  %v992 = vpop.permute.xlu0 %991
  %993 = vrot.lane.b32.xlu0 %v988, 2
  %v994 = vpop.permute.xlu0 %993
  %v995 = vsel %vm171, %v990, %v992
  %v996 = vsel %vm171, %v992, %v994
  %999 = vst [vmem:[#allocation3 + $0x20] sm:$0xf0] %v995
  %1000 = vst [vmem:[#allocation3 + $0x28] sm:$0xf0] %v996
  %v1001 = vld [vmem:[#allocation2] sm:$0xff]
  %v1002 = vld [vmem:[#allocation2 + $0x8] sm:$0xf]
  %v1003 = vld [vmem:[%s180] ss:$8 sm:$0x3]
  %v1005 = vlaneseq
  %v1006 = vshrl.u32 %v1005, 7
  %v1007 = vsub.s32 0, %v1006
  %v1008 = vrot.slane %v1003, %v1007
  %v1009 = vlaneseq
  %v1010 = vshrl.u32 %v1009, 7
  %v1011 = vsub.s32 1, %v1010
  %v1012 = vrot.slane %v1003, %v1011
  %v1013 = vcombine.low %v1008, %v1012
  %1014 = vrot.lane.b32.xlu0 %v1013, 127
  %v1015 = vpop.permute.xlu0 %1014
  %v1016 = vrot.slane %v1015, 4
  %v1017 = vsel %vm195, %v1016, %v1015
  %v1020 = vmul.f32 %v1001, %v1017
  %v1021 = vmul.f32 %v1002, %v1016
  %v1024 = vcombine.high %v1020, %v1020
  %1025 = vrot.lane.b32.xlu0 %v1020, 1
  %v1026 = vpop.permute.xlu0 %1025
  %1027 = vrot.lane.b32.xlu0 %v1024, 1
  %v1028 = vpop.permute.xlu0 %1027
  %1029 = vrot.lane.b32.xlu0 %v1021, 1
  %v1030 = vpop.permute.xlu0 %1029
  %v1031 = vsel %vm210, %v1026, %v1028
  %v1032 = vsel %vm210, %v1028, %v1030
  %1035 = vst [vmem:[#allocation3 + $0x40] sm:$0xf] %v1031
  %1036 = vst [vmem:[#allocation3 + $0x48] sm:$0xf] %v1032
  %v1037 = vld [vmem:[#allocation2 + $0x4] sm:$0xff]
  %v1038 = vld [vmem:[%s218] ss:$8 sm:$0x3]
  %v1040 = vlaneseq
  %v1041 = vshrl.u32 %v1040, 7
  %v1042 = vsub.s32 0, %v1041
  %v1043 = vrot.slane %v1038, %v1042
  %v1044 = vlaneseq
  %v1045 = vshrl.u32 %v1044, 7
  %v1046 = vsub.s32 1, %v1045
  %v1047 = vrot.slane %v1038, %v1046
  %v1048 = vcombine.low %v1043, %v1047
  %v1050 = vmul.f32 %v1037, %v1048
  %v1052 = vcombine.low %v1050, %v1050
  %1054 = vst [vmem:[#allocation3 + $0x40] sm:$0xf0] %v1052
  %1055 = vst [vmem:[#allocation3 + $0x48] sm:$0xf0] %v1050
  %v1056 = vld [vmem:[#allocation2 + $0x4] sm:$0xff]
  %v1057 = vld [vmem:[#allocation2 + $0xc] sm:$0xf]
  %v1058 = vld [vmem:[%s239] ss:$8 sm:$0x3]
  %v1060 = vlaneseq
  %v1061 = vshrl.u32 %v1060, 7
  %v1062 = vsub.s32 0, %v1061
  %v1063 = vrot.slane %v1058, %v1062
  %v1064 = vlaneseq
  %v1065 = vshrl.u32 %v1064, 7
  %v1066 = vsub.s32 1, %v1065
  %v1067 = vrot.slane %v1058, %v1066
  %v1068 = vcombine.low %v1063, %v1067
  %1069 = vrot.lane.b32.xlu0 %v1068, 14
  %v1070 = vpop.permute.xlu0 %1069
  %v1071 = vrot.slane %v1070, 4
  %v1072 = vsel %vm254, %v1071, %v1070
  %v1075 = vmul.f32 %v1056, %v1072
  %v1076 = vmul.f32 %v1057, %v1071
  %v1079 = vcombine.high %v1075, %v1075
  %1080 = vrot.lane.b32.xlu0 %v1075, 114
  %v1081 = vpop.permute.xlu0 %1080
  %1082 = vrot.lane.b32.xlu0 %v1079, 114
  %v1083 = vpop.permute.xlu0 %1082
  %1084 = vrot.lane.b32.xlu0 %v1076, 114
  %v1085 = vpop.permute.xlu0 %1084
  %v1086 = vsel %vm269, %v1081, %v1083
  %v1087 = vsel %vm269, %v1083, %v1085
  %1090 = vst [vmem:[#allocation3 + $0x60] sm:$0xf] %v1086
  %1091 = vst [vmem:[#allocation3 + $0x68] sm:$0xf] %v1087
  %v1092 = vld [vmem:[#allocation2 + $0x4] sm:$0xff]
  %v1093 = vld [vmem:[#allocation2 + $0xc] sm:$0xf]
  %v1094 = vld [vmem:[%s278] ss:$8 sm:$0x3]
  %v1096 = vlaneseq
  %v1097 = vshrl.u32 %v1096, 7
  %v1098 = vsub.s32 0, %v1097
  %v1099 = vrot.slane %v1094, %v1098
  %v1100 = vlaneseq
  %v1101 = vshrl.u32 %v1100, 7
  %v1102 = vsub.s32 1, %v1101
  %v1103 = vrot.slane %v1094, %v1102
  %v1104 = vcombine.low %v1099, %v1103
  %1105 = vrot.lane.b32.xlu0 %v1104, 15
  %v1106 = vpop.permute.xlu0 %1105
  %v1107 = vrot.slane %v1106, 4
  %v1108 = vsel %vm293, %v1107, %v1106
  %v1111 = vmul.f32 %v1092, %v1108
  %v1112 = vmul.f32 %v1093, %v1107
  %v1115 = vcombine.low %v1111, %v1111
  %v1116 = vcombine.low %v1112, %v1112
  %1117 = vrot.lane.b32.xlu0 %v1115, 113
  %v1118 = vpop.permute.xlu0 %1117
  %1119 = vrot.lane.b32.xlu0 %v1111, 113
  %v1120 = vpop.permute.xlu0 %1119
  %1121 = vrot.lane.b32.xlu0 %v1116, 113
  %v1122 = vpop.permute.xlu0 %1121
  %v1123 = vsel %vm309, %v1118, %v1120
  %v1124 = vsel %vm309, %v1120, %v1122
  %1127 = vst [vmem:[#allocation3 + $0x60] sm:$0xf0] %v1123
  %1128 = vst [vmem:[#allocation3 + $0x68] sm:$0xf0] %v1124
  %v1129 = vld [vmem:[#allocation2 + $0x4] sm:$0xff]
  %v1130 = vld [vmem:[#allocation2 + $0xc] sm:$0xf]
  %v1131 = vld [vmem:[%s318] ss:$8 sm:$0x3]
  %v1133 = vlaneseq
  %v1134 = vshrl.u32 %v1133, 7
  %v1135 = vsub.s32 0, %v1134
  %v1136 = vrot.slane %v1131, %v1135
  %v1137 = vlaneseq
  %v1138 = vshrl.u32 %v1137, 7
  %v1139 = vsub.s32 1, %v1138
  %v1140 = vrot.slane %v1131, %v1139
  %v1141 = vcombine.low %v1136, %v1140
  %1142 = vrot.lane.b32.xlu0 %v1141, 16
  %v1143 = vpop.permute.xlu0 %1142
  %v1144 = vrot.slane %v1143, 4
  %v1145 = vsel %vm131, %v1144, %v1143
  %v1148 = vmul.f32 %v1129, %v1145
  %v1149 = vmul.f32 %v1130, %v1144
  %v1152 = vcombine.high %v1148, %v1148
  %1153 = vrot.lane.b32.xlu0 %v1148, 112
  %v1154 = vpop.permute.xlu0 %1153
  %1155 = vrot.lane.b32.xlu0 %v1152, 112
  %v1156 = vpop.permute.xlu0 %1155
  %1157 = vrot.lane.b32.xlu0 %v1149, 112
  %v1158 = vpop.permute.xlu0 %1157
  %v1159 = vsel %vm116, %v1154, %v1156
  %v1160 = vsel %vm116, %v1156, %v1158
  %1163 = vst [vmem:[#allocation3 + $0x80] sm:$0xf] %v1159
  %1164 = vst [vmem:[#allocation3 + $0x88] sm:$0xf] %v1160
  %v1167 = vcombine.low %v848, %v849
  %1169 = vst [vmem:[#allocation2 + $0x4] sm:$0xff] %v1167
  %v1170 = vld [vmem:[#allocation2] sm:$0xff]
  %v1171 = vld [vmem:[#allocation2 + $0x8] sm:$0xf]
  %v1172 = vld [vmem:[%s3] ss:$8 sm:$0x3]
  %v1174 = vlaneseq
  %v1175 = vshrl.u32 %v1174, 7
  %v1176 = vsub.s32 0, %v1175
  %v1177 = vrot.slane %v1172, %v1176
  %v1178 = vlaneseq
  %v1179 = vshrl.u32 %v1178, 7
  %v1180 = vsub.s32 1, %v1179
  %v1181 = vrot.slane %v1172, %v1180
  %v1182 = vcombine.low %v1177, %v1181
  %1183 = vrot.lane.b32.xlu0 %v1182, 110
  %v1184 = vpop.permute.xlu0 %1183
  %v1185 = vrot.slane %v1184, 4
  %v1186 = vsel %vm37, %v1185, %v1184
  %v1189 = vmul.f32 %v1170, %v1186
  %v1190 = vmul.f32 %v1171, %v1185
  %v1193 = vcombine.high %v1189, %v1189
  %1194 = vrot.lane.b32.xlu0 %v1189, 18
  %v1195 = vpop.permute.xlu0 %1194
  %1196 = vrot.lane.b32.xlu0 %v1193, 18
  %v1197 = vpop.permute.xlu0 %1196
  %1198 = vrot.lane.b32.xlu0 %v1190, 18
  %v1199 = vpop.permute.xlu0 %1198
  %v1200 = vsel %vm52, %v1195, %v1197
  %v1201 = vsel %vm52, %v1197, %v1199
  %1204 = vst [vmem:[#allocation3 + $0x10] sm:$0xf] %v1200
  %1205 = vst [vmem:[#allocation3 + $0x18] sm:$0xf] %v1201
  %v1206 = vld [vmem:[#allocation2] sm:$0xff]
  %v1207 = vld [vmem:[#allocation2 + $0x8] sm:$0xf]
  %v1208 = vld [vmem:[%s61] ss:$8 sm:$0x3]
  %v1210 = vlaneseq
  %v1211 = vshrl.u32 %v1210, 7
  %v1212 = vsub.s32 0, %v1211
  %v1213 = vrot.slane %v1208, %v1212
  %v1214 = vlaneseq
  %v1215 = vshrl.u32 %v1214, 7
  %v1216 = vsub.s32 1, %v1215
  %v1217 = vrot.slane %v1208, %v1216
  %v1218 = vcombine.low %v1213, %v1217
  %1219 = vrot.lane.b32.xlu0 %v1218, 111
  %v1220 = vpop.permute.xlu0 %1219
  %v1221 = vrot.slane %v1220, 4
  %v1222 = vsel %vm76, %v1221, %v1220
  %v1225 = vmul.f32 %v1206, %v1222
  %v1226 = vmul.f32 %v1207, %v1221
  %v1229 = vcombine.low %v1225, %v1225
  %v1230 = vcombine.low %v1226, %v1226
  %1231 = vrot.lane.b32.xlu0 %v1229, 17
  %v1232 = vpop.permute.xlu0 %1231
  %1233 = vrot.lane.b32.xlu0 %v1225, 17
  %v1234 = vpop.permute.xlu0 %1233
  %1235 = vrot.lane.b32.xlu0 %v1230, 17
  %v1236 = vpop.permute.xlu0 %1235
  %v1237 = vsel %vm92, %v1232, %v1234
  %v1238 = vsel %vm92, %v1234, %v1236
  %1241 = vst [vmem:[#allocation3 + $0x10] sm:$0xf0] %v1237
  %1242 = vst [vmem:[#allocation3 + $0x18] sm:$0xf0] %v1238
  %v1243 = vld [vmem:[#allocation2] sm:$0xff]
  %v1244 = vld [vmem:[#allocation2 + $0x8] sm:$0xf]
  %v1245 = vld [vmem:[%s101] ss:$8 sm:$0x3]
  %v1247 = vlaneseq
  %v1248 = vshrl.u32 %v1247, 7
  %v1249 = vsub.s32 0, %v1248
  %v1250 = vrot.slane %v1245, %v1249
  %v1251 = vlaneseq
  %v1252 = vshrl.u32 %v1251, 7
  %v1253 = vsub.s32 1, %v1252
  %v1254 = vrot.slane %v1245, %v1253
  %v1255 = vcombine.low %v1250, %v1254
  %1256 = vrot.lane.b32.xlu0 %v1255, 112
  %v1257 = vpop.permute.xlu0 %1256
  %v1258 = vrot.slane %v1257, 4
  %v1259 = vsel %vm116, %v1258, %v1257
  %v1262 = vmul.f32 %v1243, %v1259
  %v1263 = vmul.f32 %v1244, %v1258
  %v1266 = vcombine.high %v1262, %v1262
  %1267 = vrot.lane.b32.xlu0 %v1262, 16
  %v1268 = vpop.permute.xlu0 %1267
  %1269 = vrot.lane.b32.xlu0 %v1266, 16
  %v1270 = vpop.permute.xlu0 %1269
  %1271 = vrot.lane.b32.xlu0 %v1263, 16
  %v1272 = vpop.permute.xlu0 %1271
  %v1273 = vsel %vm131, %v1268, %v1270
  %v1274 = vsel %vm131, %v1270, %v1272
  %1277 = vst [vmem:[#allocation3 + $0x30] sm:$0xf] %v1273
  %1278 = vst [vmem:[#allocation3 + $0x38] sm:$0xf] %v1274
  %v1279 = vld [vmem:[#allocation2] sm:$0xff]
  %v1280 = vld [vmem:[#allocation2 + $0x8] sm:$0xf]
  %v1281 = vld [vmem:[%s140] ss:$8 sm:$0x3]
  %v1283 = vlaneseq
  %v1284 = vshrl.u32 %v1283, 7
  %v1285 = vsub.s32 0, %v1284
  %v1286 = vrot.slane %v1281, %v1285
  %v1287 = vlaneseq
  %v1288 = vshrl.u32 %v1287, 7
  %v1289 = vsub.s32 1, %v1288
  %v1290 = vrot.slane %v1281, %v1289
  %v1291 = vcombine.low %v1286, %v1290
  %1292 = vrot.lane.b32.xlu0 %v1291, 126
  %v1293 = vpop.permute.xlu0 %1292
  %v1294 = vrot.slane %v1293, 4
  %v1295 = vsel %vm155, %v1294, %v1293
  %v1298 = vmul.f32 %v1279, %v1295
  %v1299 = vmul.f32 %v1280, %v1294
  %v1302 = vcombine.low %v1298, %v1298
  %v1303 = vcombine.low %v1299, %v1299
  %1304 = vrot.lane.b32.xlu0 %v1302, 2
  %v1305 = vpop.permute.xlu0 %1304
  %1306 = vrot.lane.b32.xlu0 %v1298, 2
  %v1307 = vpop.permute.xlu0 %1306
  %1308 = vrot.lane.b32.xlu0 %v1303, 2
  %v1309 = vpop.permute.xlu0 %1308
  %v1310 = vsel %vm171, %v1305, %v1307
  %v1311 = vsel %vm171, %v1307, %v1309
  %1314 = vst [vmem:[#allocation3 + $0x30] sm:$0xf0] %v1310
  %1315 = vst [vmem:[#allocation3 + $0x38] sm:$0xf0] %v1311
  %v1316 = vld [vmem:[#allocation2] sm:$0xff]
  %v1317 = vld [vmem:[#allocation2 + $0x8] sm:$0xf]
  %v1318 = vld [vmem:[%s180] ss:$8 sm:$0x3]
  %v1320 = vlaneseq
  %v1321 = vshrl.u32 %v1320, 7
  %v1322 = vsub.s32 0, %v1321
  %v1323 = vrot.slane %v1318, %v1322
  %v1324 = vlaneseq
  %v1325 = vshrl.u32 %v1324, 7
  %v1326 = vsub.s32 1, %v1325
  %v1327 = vrot.slane %v1318, %v1326
  %v1328 = vcombine.low %v1323, %v1327
  %1329 = vrot.lane.b32.xlu0 %v1328, 127
  %v1330 = vpop.permute.xlu0 %1329
  %v1331 = vrot.slane %v1330, 4
  %v1332 = vsel %vm195, %v1331, %v1330
  %v1335 = vmul.f32 %v1316, %v1332
  %v1336 = vmul.f32 %v1317, %v1331
  %v1339 = vcombine.high %v1335, %v1335
  %1340 = vrot.lane.b32.xlu0 %v1335, 1
  %v1341 = vpop.permute.xlu0 %1340
  %1342 = vrot.lane.b32.xlu0 %v1339, 1
  %v1343 = vpop.permute.xlu0 %1342
  %1344 = vrot.lane.b32.xlu0 %v1336, 1
  %v1345 = vpop.permute.xlu0 %1344
  %v1346 = vsel %vm210, %v1341, %v1343
  %v1347 = vsel %vm210, %v1343, %v1345
  %1350 = vst [vmem:[#allocation3 + $0x50] sm:$0xf] %v1346
  %1351 = vst [vmem:[#allocation3 + $0x58] sm:$0xf] %v1347
  %v1352 = vld [vmem:[#allocation2 + $0x4] sm:$0xff]
  %v1353 = vld [vmem:[%s218] ss:$8 sm:$0x3]
  %v1355 = vlaneseq
  %v1356 = vshrl.u32 %v1355, 7
  %v1357 = vsub.s32 0, %v1356
  %v1358 = vrot.slane %v1353, %v1357
  %v1359 = vlaneseq
  %v1360 = vshrl.u32 %v1359, 7
  %v1361 = vsub.s32 1, %v1360
  %v1362 = vrot.slane %v1353, %v1361
  %v1363 = vcombine.low %v1358, %v1362
  %v1365 = vmul.f32 %v1352, %v1363
  %v1367 = vcombine.low %v1365, %v1365
  %1369 = vst [vmem:[#allocation3 + $0x50] sm:$0xf0] %v1367
  %1370 = vst [vmem:[#allocation3 + $0x58] sm:$0xf0] %v1365
  %v1371 = vld [vmem:[#allocation2 + $0x4] sm:$0xff]
  %v1372 = vld [vmem:[#allocation2 + $0xc] sm:$0xf]
  %v1373 = vld [vmem:[%s239] ss:$8 sm:$0x3]
  %v1375 = vlaneseq
  %v1376 = vshrl.u32 %v1375, 7
  %v1377 = vsub.s32 0, %v1376
  %v1378 = vrot.slane %v1373, %v1377
  %v1379 = vlaneseq
  %v1380 = vshrl.u32 %v1379, 7
  %v1381 = vsub.s32 1, %v1380
  %v1382 = vrot.slane %v1373, %v1381
  %v1383 = vcombine.low %v1378, %v1382
  %1384 = vrot.lane.b32.xlu0 %v1383, 14
  %v1385 = vpop.permute.xlu0 %1384
  %v1386 = vrot.slane %v1385, 4
  %v1387 = vsel %vm254, %v1386, %v1385
  %v1390 = vmul.f32 %v1371, %v1387
  %v1391 = vmul.f32 %v1372, %v1386
  %v1394 = vcombine.high %v1390, %v1390
  %1395 = vrot.lane.b32.xlu0 %v1390, 114
  %v1396 = vpop.permute.xlu0 %1395
  %1397 = vrot.lane.b32.xlu0 %v1394, 114
  %v1398 = vpop.permute.xlu0 %1397
  %1399 = vrot.lane.b32.xlu0 %v1391, 114
  %v1400 = vpop.permute.xlu0 %1399
  %v1401 = vsel %vm269, %v1396, %v1398
  %v1402 = vsel %vm269, %v1398, %v1400
  %1405 = vst [vmem:[#allocation3 + $0x70] sm:$0xf] %v1401
  %1406 = vst [vmem:[#allocation3 + $0x78] sm:$0xf] %v1402
  %v1407 = vld [vmem:[#allocation2 + $0x4] sm:$0xff]
  %v1408 = vld [vmem:[#allocation2 + $0xc] sm:$0xf]
  %v1409 = vld [vmem:[%s278] ss:$8 sm:$0x3]
  %v1411 = vlaneseq
  %v1412 = vshrl.u32 %v1411, 7
  %v1413 = vsub.s32 0, %v1412
  %v1414 = vrot.slane %v1409, %v1413
  %v1415 = vlaneseq
  %v1416 = vshrl.u32 %v1415, 7
  %v1417 = vsub.s32 1, %v1416
  %v1418 = vrot.slane %v1409, %v1417
  %v1419 = vcombine.low %v1414, %v1418
  %1420 = vrot.lane.b32.xlu0 %v1419, 15
  %v1421 = vpop.permute.xlu0 %1420
  %v1422 = vrot.slane %v1421, 4
  %v1423 = vsel %vm293, %v1422, %v1421
  %v1426 = vmul.f32 %v1407, %v1423
  %v1427 = vmul.f32 %v1408, %v1422
  %v1430 = vcombine.low %v1426, %v1426
  %v1431 = vcombine.low %v1427, %v1427
  %1432 = vrot.lane.b32.xlu0 %v1430, 113
  %v1433 = vpop.permute.xlu0 %1432
  %1434 = vrot.lane.b32.xlu0 %v1426, 113
  %v1435 = vpop.permute.xlu0 %1434
  %1436 = vrot.lane.b32.xlu0 %v1431, 113
  %v1437 = vpop.permute.xlu0 %1436
  %v1438 = vsel %vm309, %v1433, %v1435
  %v1439 = vsel %vm309, %v1435, %v1437
  %1442 = vst [vmem:[#allocation3 + $0x70] sm:$0xf0] %v1438
  %1443 = vst [vmem:[#allocation3 + $0x78] sm:$0xf0] %v1439
  %v1444 = vld [vmem:[#allocation2 + $0x4] sm:$0xff]
  %v1445 = vld [vmem:[#allocation2 + $0xc] sm:$0xf]
  %v1446 = vld [vmem:[%s318] ss:$8 sm:$0x3]
  %v1448 = vlaneseq
  %v1449 = vshrl.u32 %v1448, 7
  %v1450 = vsub.s32 0, %v1449
  %v1451 = vrot.slane %v1446, %v1450
  %v1452 = vlaneseq
  %v1453 = vshrl.u32 %v1452, 7
  %v1454 = vsub.s32 1, %v1453
  %v1455 = vrot.slane %v1446, %v1454
  %v1456 = vcombine.low %v1451, %v1455
  %1457 = vrot.lane.b32.xlu0 %v1456, 16
  %v1458 = vpop.permute.xlu0 %1457
  %v1459 = vrot.slane %v1458, 4
  %v1460 = vsel %vm131, %v1459, %v1458
  %v1463 = vmul.f32 %v1444, %v1460
  %v1464 = vmul.f32 %v1445, %v1459
  %v1467 = vcombine.high %v1463, %v1463
  %1468 = vrot.lane.b32.xlu0 %v1463, 112
  %v1469 = vpop.permute.xlu0 %1468
  %1470 = vrot.lane.b32.xlu0 %v1467, 112
  %v1471 = vpop.permute.xlu0 %1470
  %1472 = vrot.lane.b32.xlu0 %v1464, 112
  %v1473 = vpop.permute.xlu0 %1472
  %v1474 = vsel %vm116, %v1469, %v1471
  %v1475 = vsel %vm116, %v1471, %v1473
  %1478 = vst [vmem:[#allocation3 + $0x90] sm:$0xf] %v1474
  %1479 = vst [vmem:[#allocation3 + $0x98] sm:$0xf] %v1475
  %v1480 = vld [vmem:[%s2] sm:$0xf]
  %v1481 = vld [vmem:[#allocation3] sm:$0xff]
  %v1482 = vld [vmem:[#allocation3 + $0x8] sm:$0xff]
  %v1483 = vld [vmem:[#allocation3 + $0x10] sm:$0xff]
  %v1484 = vld [vmem:[#allocation3 + $0x18] sm:$0xff]
  %v1485 = vld [vmem:[#allocation3 + $0x20] sm:$0xff]
  %v1486 = vld [vmem:[#allocation3 + $0x28] sm:$0xff]
  %v1487 = vld [vmem:[#allocation3 + $0x30] sm:$0xff]
  %v1488 = vld [vmem:[#allocation3 + $0x38] sm:$0xff]
  %v1489 = vld [vmem:[#allocation3 + $0x40] sm:$0xff]
  %v1490 = vld [vmem:[#allocation3 + $0x48] sm:$0xff]
  %v1491 = vld [vmem:[#allocation3 + $0x50] sm:$0xff]
  %v1492 = vld [vmem:[#allocation3 + $0x58] sm:$0xff]
  %v1493 = vld [vmem:[#allocation3 + $0x60] sm:$0xff]
  %v1494 = vld [vmem:[#allocation3 + $0x68] sm:$0xff]
  %v1495 = vld [vmem:[#allocation3 + $0x70] sm:$0xff]
  %v1496 = vld [vmem:[#allocation3 + $0x78] sm:$0xff]
  %v1497 = vld [vmem:[#allocation3 + $0x80] sm:$0xf]
  %v1498 = vld [vmem:[#allocation3 + $0x88] sm:$0xf]
  %v1499 = vld [vmem:[#allocation3 + $0x90] sm:$0xf]
  %v1500 = vld [vmem:[#allocation3 + $0x98] sm:$0xf]
  %v1502 = vsel %vm687, %v1480, 0
  %v1505 = vsel %vm691, %v1497, 0
  %v1508 = vsel %vm691, %v1498, 0
  %v1511 = vsel %vm691, %v1499, 0
  %v1514 = vsel %vm691, %v1500, 0
  %1516 = vmatprep.subr.mxu0 %v1482
  %1517 = vmatpush1.msra.mxu0 %v1481
  %1518 = vmatprep.subr.mxu0 %v1486
  %1519 = vmatpush1.msra.mxu0 %v1485
  %1520 = vmatprep.subr.mxu0 %v1490
  %1521 = vmatpush1.msra.mxu0 %v1489
  %1522 = vmatprep.subr.mxu0 %v1494
  %1523 = vmatpush1.msra.mxu0 %v1493
  %1524 = vmatprep.subr.mxu0 %v1508
  %1525 = vmatpush1.msra.mxu0 %v1505
  %1526 = vmatprep.subr.mxu0 0.0
  %1527 = vmatpush1.msra.mxu0 0.0
  %1528 = vmatprep.subr.mxu0 0.0
  %1529 = vmatpush1.msra.mxu0 0.0
  %1530 = vmatprep.subr.mxu0 0.0
  %1531 = vmatpush1.msra.mxu0 0.0
  %1532 = vmatprep.subr.mxu0 0.0
  %1533 = vmatpush1.msra.mxu0 0.0
  %1534 = vmatprep.subr.mxu0 0.0
  %1535 = vmatpush1.msra.mxu0 0.0
  %1536 = vmatprep.subr.mxu0 0.0
  %1537 = vmatpush1.msra.mxu0 0.0
  %1538 = vmatprep.subr.mxu0 0.0
  %1539 = vmatpush1.msra.mxu0 0.0
  %1540 = vmatprep.subr.mxu0 0.0
  %1541 = vmatpush1.msra.mxu0 0.0
  %1542 = vmatprep.subr.mxu0 0.0
  %1543 = vmatpush1.msra.mxu0 0.0
  %1544 = vmatprep.subr.mxu0 0.0
  %1545 = vmatpush1.msra.mxu0 0.0
  %1546 = vmatprep.subr.mxu0 0.0
  %1547 = vmatpush1.msra.mxu0 0.0
  %1548 = vmatprep.subr.mxu0 0.0
  %1549 = vmatpush1.msra.mxu0 0.0
  %1550 = vmatprep.subr.mxu0 0.0
  %1551 = vmatpush1.msra.mxu0 0.0
  %1552 = vmatprep.subr.mxu0 0.0
  %1553 = vmatpush1.msra.mxu0 0.0
  %1554 = vmatprep.subr.mxu0 0.0
  %1555 = vmatpush1.msra.mxu0 0.0
  %1556 = vmatprep.subr.mxu0 0.0
  %1557 = vmatpush1.msra.mxu0 0.0
  %1558 = vmatprep.subr.mxu0 0.0
  %1559 = vmatpush1.msra.mxu0 0.0
  %1560 = vmatprep.subr.mxu0 0.0
  %1561 = vmatpush1.msra.mxu0 0.0
  %1562 = vmatprep.subr.mxu0 0.0
  %1563 = vmatpush1.msra.mxu0 0.0
  %1564 = vmatprep.subr.mxu0 0.0
  %1565 = vmatpush1.msra.mxu0 0.0
  %1566 = vmatprep.subr.mxu0 0.0
  %1567 = vmatpush1.msra.mxu0 0.0
  %1568 = vmatprep.subr.mxu0 0.0
  %1569 = vmatpush1.msra.mxu0 0.0
  %1570 = vmatprep.subr.mxu0 0.0
  %1571 = vmatpush1.msra.mxu0 0.0
  %1572 = vmatprep.subr.mxu0 0.0
  %1573 = vmatpush1.msra.mxu0 0.0
  %1574 = vmatprep.subr.mxu0 0.0
  %1575 = vmatpush1.msra.mxu0 0.0
  %1576 = vmatprep.subr.mxu0 0.0
  %1577 = vmatpush1.msra.mxu0 0.0
  %1578 = vmatprep.subr.mxu0 0.0
  %1579 = vmatpush1.msra.mxu0 0.0
  %1580 = vmatprep.mubr.f32.mxu0 0.0
  %1581 = vmatmul.mubr.f32.gmra.mrb[0].mxu0 %v1502
  %v1582 = vpop.f32.mrb[0].mxu0
  %v1583 = vadd.f32 0.0, %v1582
  %v1584 = vpop.f32.mrb[0].mxu0
  %v1585 = vadd.f32 0.0, %v1584
  %1586 = vdwg.mxu0
  %1587 = vmatprep.subr.mxu0 %v1484
  %1588 = vmatpush1.msra.mxu0 %v1483
  %1589 = vmatprep.subr.mxu0 %v1488
  %1590 = vmatpush1.msra.mxu0 %v1487
  %1591 = vmatprep.subr.mxu0 %v1492
  %1592 = vmatpush1.msra.mxu0 %v1491
  %1593 = vmatprep.subr.mxu0 %v1496
  %1594 = vmatpush1.msra.mxu0 %v1495
  %1595 = vmatprep.subr.mxu0 %v1514
  %1596 = vmatpush1.msra.mxu0 %v1511
  %1597 = vmatprep.subr.mxu0 0.0
  %1598 = vmatpush1.msra.mxu0 0.0
  %1599 = vmatprep.subr.mxu0 0.0
  %1600 = vmatpush1.msra.mxu0 0.0
  %1601 = vmatprep.subr.mxu0 0.0
  %1602 = vmatpush1.msra.mxu0 0.0
  %1603 = vmatprep.subr.mxu0 0.0
  %1604 = vmatpush1.msra.mxu0 0.0
  %1605 = vmatprep.subr.mxu0 0.0
  %1606 = vmatpush1.msra.mxu0 0.0
  %1607 = vmatprep.subr.mxu0 0.0
  %1608 = vmatpush1.msra.mxu0 0.0
  %1609 = vmatprep.subr.mxu0 0.0
  %1610 = vmatpush1.msra.mxu0 0.0
  %1611 = vmatprep.subr.mxu0 0.0
  %1612 = vmatpush1.msra.mxu0 0.0
  %1613 = vmatprep.subr.mxu0 0.0
  %1614 = vmatpush1.msra.mxu0 0.0
  %1615 = vmatprep.subr.mxu0 0.0
  %1616 = vmatpush1.msra.mxu0 0.0
  %1617 = vmatprep.subr.mxu0 0.0
  %1618 = vmatpush1.msra.mxu0 0.0
  %1619 = vmatprep.subr.mxu0 0.0
  %1620 = vmatpush1.msra.mxu0 0.0
  %1621 = vmatprep.subr.mxu0 0.0
  %1622 = vmatpush1.msra.mxu0 0.0
  %1623 = vmatprep.subr.mxu0 0.0
  %1624 = vmatpush1.msra.mxu0 0.0
  %1625 = vmatprep.subr.mxu0 0.0
  %1626 = vmatpush1.msra.mxu0 0.0
  %1627 = vmatprep.subr.mxu0 0.0
  %1628 = vmatpush1.msra.mxu0 0.0
  %1629 = vmatprep.subr.mxu0 0.0
  %1630 = vmatpush1.msra.mxu0 0.0
  %1631 = vmatprep.subr.mxu0 0.0
  %1632 = vmatpush1.msra.mxu0 0.0
  %1633 = vmatprep.subr.mxu0 0.0
  %1634 = vmatpush1.msra.mxu0 0.0
  %1635 = vmatprep.subr.mxu0 0.0
  %1636 = vmatpush1.msra.mxu0 0.0
  %1637 = vmatprep.subr.mxu0 0.0
  %1638 = vmatpush1.msra.mxu0 0.0
  %1639 = vmatprep.subr.mxu0 0.0
  %1640 = vmatpush1.msra.mxu0 0.0
  %1641 = vmatprep.subr.mxu0 0.0
  %1642 = vmatpush1.msra.mxu0 0.0
  %1643 = vmatprep.subr.mxu0 0.0
  %1644 = vmatpush1.msra.mxu0 0.0
  %1645 = vmatprep.subr.mxu0 0.0
  %1646 = vmatpush1.msra.mxu0 0.0
  %1647 = vmatprep.subr.mxu0 0.0
  %1648 = vmatpush1.msra.mxu0 0.0
  %1649 = vmatprep.subr.mxu0 0.0
  %1650 = vmatpush1.msra.mxu0 0.0
  %1651 = vmatprep.mubr.f32.mxu0 0.0
  %1652 = vmatmul.mubr.f32.gmra.mrb[0].mxu0 %v1502
  %v1653 = vpop.f32.mrb[0].mxu0
  %v1654 = vadd.f32 0.0, %v1653
  %v1655 = vpop.f32.mrb[0].mxu0
  %v1656 = vadd.f32 0.0, %v1655
  %1657 = vdwg.mxu0
  %v1658 = vld [vmem:[%s0] sm:$0xff]
  %v1660 = vcombine.high %v1658, %v1658
  %v1662 = vadd.f32 %v1583, %v1658
  %v1663 = vadd.f32 %v1585, %v1660
  %v1664 = vmax.f32 %v1662, 0.0
  %v1665 = vmax.f32 %v1663, 0.0
  %v1668 = vcombine.low %v1664, %v1665
  %1670 = vst [vmem:[%s4] sm:$0xff] %v1668
  %v1671 = vld [vmem:[%s353] sm:$0xff]
  %v1673 = vcombine.high %v1671, %v1671
  %v1675 = vadd.f32 %v1654, %v1671
  %v1676 = vadd.f32 %v1656, %v1673
  %v1677 = vmax.f32 %v1675, 0.0
  %v1678 = vmax.f32 %v1676, 0.0
  %v1681 = vcombine.low %v1677, %v1678
  %s1683 = scalar_lea.vmem %s4, 8
  %1684 = vst [vmem:[%s1683] sm:$0xff] %v1681
  // Predicated region
  $region18: #{basic_block_forward.1} parent=0 // pred_check
    _
  $region19: #{basic_block_forward.1} parent=0 // pred_check_branch
    %1686 = sbr.rel (0) target = $region21
  $region20: #{basic_block_forward.1} parent=0 // pred_region
    _
  $region21: #{basic_block_forward.1} parent=0 // pred_fallthru
    _
  // Predicated region
  $region22: #{basic_block_forward.1} parent=0 // pred_check
    _
  $region23: #{basic_block_forward.1} parent=0 // pred_check_branch
    %1688 = sbr.rel (0) target = $region25
  $region24: #{basic_block_forward.1} parent=0 // pred_region
    _
  $region25: #{basic_block_forward.1} parent=0 // pred_fallthru
    _

</llo_original>
